<compile_context>
chip_gen: v5e
topology: v5e:2x2
jax: 0.10.0
libtpu: 0.0.40
codegen_flags: <defaults>
</compile_context>

<pallas_src>
import functools

import jax
import jax.numpy as jnp
from jax.experimental import pallas as pl
from jax.experimental.pallas import tpu as pltpu


# -----------------------------------------------------------------------------
# Pallas kernel: 9 accumulated tap-matmuls + bias + SiLU, compact NCHW store
# -----------------------------------------------------------------------------
def _conv3x3s2_bn_silu_kernel(ph_ref, w_ref, b_ref, o_ref, *, Ho, Wo, PW):
    # ph_ref: (1, 4, C, F)     bf16  4 stride-2 phases of the padded image,
    #                                flattened per phase; F = (Ho+2)*PW.
    #                                Resident per batch (constant index map).
    # w_ref : (9, TCO, C)      bf16  per-tap fused Conv+BN weights (Cout block).
    # b_ref : (TCO, 1)         f32   fused bias (Cout block).
    # o_ref : (1, TCO, Ho, Wo) bf16  NCHW-contiguous output block.
    L = Ho * PW                                   # strip: Ho rows x PW lanes
    phases = [ph_ref[0, p] for p in range(4)]     # 4 x (C, F) bf16

    acc = None
    for t in range(9):                            # static unroll over taps
        ky, kx = divmod(t, 3)
        p = 2 * (ky % 2) + (kx % 2)               # parity phase for this tap
        off = (ky // 2) * PW + (kx // 2)          # static lane offset
        strip = phases[p][:, off:off + L]         # (C, L) bf16, static slice
        part = jnp.dot(w_ref[t], strip, preferred_element_type=jnp.float32)
        acc = part if acc is None else acc + part  # (TCO, L) f32 accumulation

    acc = acc + b_ref[...]                        # bias, broadcast over lanes
    y = (acc * jax.nn.sigmoid(acc)).astype(o_ref.dtype)   # SiLU (EUP), one cast

    # Compact store: drop the single junk lane per row (PW = Wo + 1) in VMEM so
    # the HBM output is already dense NCHW -- no wrapper-side slice pass.
    for r in range(Ho):                           # static unroll (Ho small for stem)
        o_ref[0, :, r, :] = y[:, r * PW:r * PW + Wo]


def conv3x3s2_bn_silu(x_nchw, w_oihw, bias, *, out_dtype=jnp.bfloat16):
    """Fused Conv(k=3, s=2, p=1) + BN (pre-folded) + SiLU, NCHW in / NCHW out."""
    B, C, H, W = x_nchw.shape
    Cout = w_oihw.shape[0]
    k, s, pad = 3, 2, 1
    Ho = (H + 2 * pad - k) // s + 1
    Wo = (W + 2 * pad - k) // s + 1
    PH, PW = Ho + 1, Wo + 1                       # phase extents (incl. tap halo)
    F = (PH + 1) * PW                             # +1 zero phase-row: tap(2,2) overread

    # --- phase split (layout plumbing, ~1x input bytes; replaces 9x im2col) ----
    xb = x_nchw.astype(jnp.bfloat16)              # single bf16 cast (MXU-native)
    canvas = jnp.zeros((B, C, 2 * PH + 2, 2 * PW), jnp.bfloat16)
    canvas = canvas.at[:, :, pad:pad + H, pad:pad + W].set(xb)
    ph = canvas.reshape(B, C, PH + 1, 2, PW, 2)
    ph = ph.transpose(0, 3, 5, 1, 2, 4)           # (B, py, px, C, PH+1, PW)
    ph = ph.reshape(B, 4, C, F)                   # flat per-phase spatial

    # --- per-tap weights: (Cout, Cin, 3, 3) -> (9, Cout, Cin), tap = ky*3+kx ---
    w_taps = jnp.transpose(w_oihw, (2, 3, 0, 1)).reshape(9, Cout, C).astype(jnp.bfloat16)
    b_col = bias.reshape(Cout, 1).astype(jnp.float32)

    # Cout blocking: guarantees >=2 parallel grid steps even at B=1 (v7x: 2 TCs).
    TCO = Cout // 2 if (Cout % 2 == 0 and (Cout // 2) % 8 == 0) else Cout
    grid = (B, Cout // TCO)

    kernel = functools.partial(_conv3x3s2_bn_silu_kernel, Ho=Ho, Wo=Wo, PW=PW)
    return pl.pallas_call(
        kernel,
        out_shape=jax.ShapeDtypeStruct((B, Cout, Ho, Wo), out_dtype),
        grid_spec=pltpu.PrefetchScalarGridSpec(
            num_scalar_prefetch=0,
            grid=grid,
            in_specs=[
                # Whole phase block per batch; constant over the Cout axis -> one
                # DMA per image, stays VMEM-resident across Cout steps.
                pl.BlockSpec((1, 4, C, F), lambda b, co: (b, 0, 0, 0)),
                pl.BlockSpec((9, TCO, C), lambda b, co: (0, co, 0)),
                pl.BlockSpec((TCO, 1), lambda b, co: (co, 0)),
            ],
            out_specs=pl.BlockSpec((1, TCO, Ho, Wo), lambda b, co: (b, co, 0, 0)),
        ),
        compiler_params=pltpu.CompilerParams(
            dimension_semantics=("parallel", "parallel"),
            # Comfortable on v5e/v6e (128 MiB) and v7x (64 MiB physical / 32 scoped).
            vmem_limit_bytes=32 * 1024 * 1024,
        ),
    )(ph, w_taps, b_col)


# -----------------------------------------------------------------------------
# Glue: synthetic fused weights, AutoBackend-analog forward, reference
# -----------------------------------------------------------------------------
def make_params(c_in, c_out, k=3, seed=0):
    """Deterministic synthetic fused Conv+BN weights (torch layout: (Cout,Cin,k,k))."""
    key = jax.random.PRNGKey(seed)
    kw, kb = jax.random.split(key)
    w_oihw = jax.random.normal(kw, (c_out, c_in, k, k), jnp.float32) * 0.1
    b = jax.random.normal(kb, (c_out,), jnp.float32) * 0.05
    return w_oihw, b


class AutoBackendPallas:
    """Minimal AutoBackend analog: pt=True, fuse=True (Conv+BN folded), nhwc=False."""

    def __init__(self, c_in=4, c_out=32, stride=32, fp16=False, nhwc=False):
        self.fp16 = fp16
        self.nhwc = nhwc
        self.stride = stride
        self.c_out = c_out
        self.names = {i: f"class{i}" for i in range(c_out)}
        self.w_oihw, self.bias = make_params(c_in, c_out)
        # TODO(synk): the full YOLOv8 graph behind attempt_load_weights (CSP blocks,
        # SPPF, detect head) has no in-script equivalent; the fused Conv+SiLU stem
        # stands in for self.model.

    def forward(self, im, augment=False, visualize=False):
        # im: (B, C, H, W) float32 -- PyTorch NCHW convention (AutoBackend contract)
        b, ch, h, w = im.shape
        if self.fp16 and im.dtype != jnp.bfloat16:
            # "half precision" on TPU == bf16: one cast (no f32->f16->bf16 round-trip).
            im = im.astype(jnp.bfloat16)
        if self.nhwc:
            im = jnp.transpose(im, (0, 2, 3, 1))   # mirrors im.permute(0, 2, 3, 1)

        # --- self.model(im): fused Conv(k=3,s=2,p=1)+BN -> SiLU -----------------
        x = jnp.transpose(im, (0, 3, 1, 2)) if self.nhwc else im   # model eats NCHW
        # bf16 output: downstream layers consume bf16; halves the output HBM stream.
        y = conv3x3s2_bn_silu(x, self.w_oihw, self.bias, out_dtype=jnp.bfloat16)
        # AutoBackend returns y (single tensor path -> from_numpy passthrough)
        return y

    __call__ = forward


def _reference_forward(im, w_oihw, bias):
    """Plain-JAX reference with matching numerics (bf16 operands, f32 accumulate)."""
    y = jax.lax.conv_general_dilated(
        im.astype(jnp.bfloat16), w_oihw.astype(jnp.bfloat16),
        window_strides=(2, 2), padding=((1, 1), (1, 1)),
        dimension_numbers=("NCHW", "OIHW", "NCHW"),
        preferred_element_type=jnp.float32)
    y = y + bias[None, :, None, None]
    return y * jax.nn.sigmoid(y)


if __name__ == "__main__":
    key = jax.random.PRNGKey(0)
    B, C, H, W = 2, 4, 16, 16
    im = jax.random.normal(key, (B, C, H, W), jnp.float32)

    backend = AutoBackendPallas(c_in=C, c_out=32)
    out = backend(im)
    out = jax.block_until_ready(out)

    ref = _reference_forward(im, backend.w_oihw, backend.bias)
    assert out.shape == (B, 32, H // 2, W // 2), out.shape
    assert out.dtype == jnp.bfloat16, out.dtype
    out_f32 = out.astype(jnp.float32)
    if not jnp.allclose(out_f32, ref, atol=2e-2, rtol=2e-2):
        err = float(jnp.max(jnp.abs(out_f32 - ref)))
        raise AssertionError(f"Pallas conv+SiLU does not match reference (max err {err})")

    print("KERNEL_OK")
</pallas_src>

<mosaic_0001>
module attributes {stable_mosaic.version = 11 : i64} {
  func.func @_conv3x3s2_bn_silu_kernel(%arg0: i32, %arg1: i32, %arg2: memref<1x4x4x90xbf16, #tpu.memory_space<vmem>>, %arg3: memref<9x16x4xbf16, #tpu.memory_space<vmem>>, %arg4: memref<16x1xf32, #tpu.memory_space<vmem>>, %arg5: memref<1x16x8x8xbf16, #tpu.memory_space<vmem>>) attributes {dimension_semantics = [#tpu.dimension_semantics<parallel>, #tpu.dimension_semantics<parallel>], iteration_bounds = array<i64: 2, 2>, scalar_prefetch = 0 : i64, scratch_operands = 0 : i64, tpu.core_type = #tpu.core_type<tc>, window_params = [{transform_indices = @transform_0, window_bounds = array<i64: 1, 4, 4, 90>}, {transform_indices = @transform_1, window_bounds = array<i64: 9, 16, 4>}, {transform_indices = @transform_2, window_bounds = array<i64: 16, 1>}, {transform_indices = @transform_3, window_bounds = array<i64: 1, 16, 8, 8>}]} {
    %c0 = arith.constant 0 : index
    %c0_0 = arith.constant 0 : index
    %c0_1 = arith.constant 0 : index
    %c0_2 = arith.constant 0 : index
    %0 = vector.load %arg2[%c0, %c0_0, %c0_1, %c0_2] : memref<1x4x4x90xbf16, #tpu.memory_space<vmem>>, vector<1x1x4x90xbf16>
    %1 = vector.shape_cast %0 : vector<1x1x4x90xbf16> to vector<4x90xbf16>
    %c0_3 = arith.constant 0 : index
    %c1 = arith.constant 1 : index
    %c0_4 = arith.constant 0 : index
    %c0_5 = arith.constant 0 : index
    %2 = vector.load %arg2[%c0_3, %c1, %c0_4, %c0_5] : memref<1x4x4x90xbf16, #tpu.memory_space<vmem>>, vector<1x1x4x90xbf16>
    %3 = vector.shape_cast %2 : vector<1x1x4x90xbf16> to vector<4x90xbf16>
    %c0_6 = arith.constant 0 : index
    %c2 = arith.constant 2 : index
    %c0_7 = arith.constant 0 : index
    %c0_8 = arith.constant 0 : index
    %4 = vector.load %arg2[%c0_6, %c2, %c0_7, %c0_8] : memref<1x4x4x90xbf16, #tpu.memory_space<vmem>>, vector<1x1x4x90xbf16>
    %5 = vector.shape_cast %4 : vector<1x1x4x90xbf16> to vector<4x90xbf16>
    %c0_9 = arith.constant 0 : index
    %c3 = arith.constant 3 : index
    %c0_10 = arith.constant 0 : index
    %c0_11 = arith.constant 0 : index
    %6 = vector.load %arg2[%c0_9, %c3, %c0_10, %c0_11] : memref<1x4x4x90xbf16, #tpu.memory_space<vmem>>, vector<1x1x4x90xbf16>
    %7 = vector.shape_cast %6 : vector<1x1x4x90xbf16> to vector<4x90xbf16>
    %8 = vector.extract_strided_slice %1 {offsets = [0, 0], sizes = [4, 72], strides = [1, 1]} : vector<4x90xbf16> to vector<4x72xbf16>
    %c0_12 = arith.constant 0 : index
    %c0_13 = arith.constant 0 : index
    %c0_14 = arith.constant 0 : index
    %9 = vector.load %arg3[%c0_12, %c0_13, %c0_14] : memref<9x16x4xbf16, #tpu.memory_space<vmem>>, vector<1x16x4xbf16>
    %10 = vector.shape_cast %9 : vector<1x16x4xbf16> to vector<16x4xbf16>
    %cst = arith.constant dense<0.000000e+00> : vector<16x72xf32>
    %11 = tpu.matmul %10, %8, %cst {dimension_numbers = #tpu.dot_dimension_numbers<[1], [0], [0], [1], [0, 0, 1, 1], [], []>} : vector<16x4xbf16>, vector<4x72xbf16>, vector<16x72xf32> -> vector<16x72xf32>
    %12 = vector.extract_strided_slice %3 {offsets = [0, 0], sizes = [4, 72], strides = [1, 1]} : vector<4x90xbf16> to vector<4x72xbf16>
    %c1_15 = arith.constant 1 : index
    %c0_16 = arith.constant 0 : index
    %c0_17 = arith.constant 0 : index
    %13 = vector.load %arg3[%c1_15, %c0_16, %c0_17] : memref<9x16x4xbf16, #tpu.memory_space<vmem>>, vector<1x16x4xbf16>
    %14 = vector.shape_cast %13 : vector<1x16x4xbf16> to vector<16x4xbf16>
    %cst_18 = arith.constant dense<0.000000e+00> : vector<16x72xf32>
    %15 = tpu.matmul %14, %12, %cst_18 {dimension_numbers = #tpu.dot_dimension_numbers<[1], [0], [0], [1], [0, 0, 1, 1], [], []>} : vector<16x4xbf16>, vector<4x72xbf16>, vector<16x72xf32> -> vector<16x72xf32>
    %16 = arith.addf %11, %15 : vector<16x72xf32>
    %17 = vector.extract_strided_slice %1 {offsets = [0, 1], sizes = [4, 72], strides = [1, 1]} : vector<4x90xbf16> to vector<4x72xbf16>
    %c2_19 = arith.constant 2 : index
    %c0_20 = arith.constant 0 : index
    %c0_21 = arith.constant 0 : index
    %18 = vector.load %arg3[%c2_19, %c0_20, %c0_21] : memref<9x16x4xbf16, #tpu.memory_space<vmem>>, vector<1x16x4xbf16>
    %19 = vector.shape_cast %18 : vector<1x16x4xbf16> to vector<16x4xbf16>
    %cst_22 = arith.constant dense<0.000000e+00> : vector<16x72xf32>
    %20 = tpu.matmul %19, %17, %cst_22 {dimension_numbers = #tpu.dot_dimension_numbers<[1], [0], [0], [1], [0, 0, 1, 1], [], []>} : vector<16x4xbf16>, vector<4x72xbf16>, vector<16x72xf32> -> vector<16x72xf32>
    %21 = arith.addf %16, %20 : vector<16x72xf32>
    %22 = vector.extract_strided_slice %5 {offsets = [0, 0], sizes = [4, 72], strides = [1, 1]} : vector<4x90xbf16> to vector<4x72xbf16>
    %c3_23 = arith.constant 3 : index
    %c0_24 = arith.constant 0 : index
    %c0_25 = arith.constant 0 : index
    %23 = vector.load %arg3[%c3_23, %c0_24, %c0_25] : memref<9x16x4xbf16, #tpu.memory_space<vmem>>, vector<1x16x4xbf16>
    %24 = vector.shape_cast %23 : vector<1x16x4xbf16> to vector<16x4xbf16>
    %cst_26 = arith.constant dense<0.000000e+00> : vector<16x72xf32>
    %25 = tpu.matmul %24, %22, %cst_26 {dimension_numbers = #tpu.dot_dimension_numbers<[1], [0], [0], [1], [0, 0, 1, 1], [], []>} : vector<16x4xbf16>, vector<4x72xbf16>, vector<16x72xf32> -> vector<16x72xf32>
    %26 = arith.addf %21, %25 : vector<16x72xf32>
    %27 = vector.extract_strided_slice %7 {offsets = [0, 0], sizes = [4, 72], strides = [1, 1]} : vector<4x90xbf16> to vector<4x72xbf16>
    %c4 = arith.constant 4 : index
    %c0_27 = arith.constant 0 : index
    %c0_28 = arith.constant 0 : index
    %28 = vector.load %arg3[%c4, %c0_27, %c0_28] : memref<9x16x4xbf16, #tpu.memory_space<vmem>>, vector<1x16x4xbf16>
    %29 = vector.shape_cast %28 : vector<1x16x4xbf16> to vector<16x4xbf16>
    %cst_29 = arith.constant dense<0.000000e+00> : vector<16x72xf32>
    %30 = tpu.matmul %29, %27, %cst_29 {dimension_numbers = #tpu.dot_dimension_numbers<[1], [0], [0], [1], [0, 0, 1, 1], [], []>} : vector<16x4xbf16>, vector<4x72xbf16>, vector<16x72xf32> -> vector<16x72xf32>
    %31 = arith.addf %26, %30 : vector<16x72xf32>
    %32 = vector.extract_strided_slice %5 {offsets = [0, 1], sizes = [4, 72], strides = [1, 1]} : vector<4x90xbf16> to vector<4x72xbf16>
    %c5 = arith.constant 5 : index
    %c0_30 = arith.constant 0 : index
    %c0_31 = arith.constant 0 : index
    %33 = vector.load %arg3[%c5, %c0_30, %c0_31] : memref<9x16x4xbf16, #tpu.memory_space<vmem>>, vector<1x16x4xbf16>
    %34 = vector.shape_cast %33 : vector<1x16x4xbf16> to vector<16x4xbf16>
    %cst_32 = arith.constant dense<0.000000e+00> : vector<16x72xf32>
    %35 = tpu.matmul %34, %32, %cst_32 {dimension_numbers = #tpu.dot_dimension_numbers<[1], [0], [0], [1], [0, 0, 1, 1], [], []>} : vector<16x4xbf16>, vector<4x72xbf16>, vector<16x72xf32> -> vector<16x72xf32>
    %36 = arith.addf %31, %35 : vector<16x72xf32>
    %37 = vector.extract_strided_slice %1 {offsets = [0, 9], sizes = [4, 72], strides = [1, 1]} : vector<4x90xbf16> to vector<4x72xbf16>
    %c6 = arith.constant 6 : index
    %c0_33 = arith.constant 0 : index
    %c0_34 = arith.constant 0 : index
    %38 = vector.load %arg3[%c6, %c0_33, %c0_34] : memref<9x16x4xbf16, #tpu.memory_space<vmem>>, vector<1x16x4xbf16>
    %39 = vector.shape_cast %38 : vector<1x16x4xbf16> to vector<16x4xbf16>
    %cst_35 = arith.constant dense<0.000000e+00> : vector<16x72xf32>
    %40 = tpu.matmul %39, %37, %cst_35 {dimension_numbers = #tpu.dot_dimension_numbers<[1], [0], [0], [1], [0, 0, 1, 1], [], []>} : vector<16x4xbf16>, vector<4x72xbf16>, vector<16x72xf32> -> vector<16x72xf32>
    %41 = arith.addf %36, %40 : vector<16x72xf32>
    %42 = vector.extract_strided_slice %3 {offsets = [0, 9], sizes = [4, 72], strides = [1, 1]} : vector<4x90xbf16> to vector<4x72xbf16>
    %c7 = arith.constant 7 : index
    %c0_36 = arith.constant 0 : index
    %c0_37 = arith.constant 0 : index
    %43 = vector.load %arg3[%c7, %c0_36, %c0_37] : memref<9x16x4xbf16, #tpu.memory_space<vmem>>, vector<1x16x4xbf16>
    %44 = vector.shape_cast %43 : vector<1x16x4xbf16> to vector<16x4xbf16>
    %cst_38 = arith.constant dense<0.000000e+00> : vector<16x72xf32>
    %45 = tpu.matmul %44, %42, %cst_38 {dimension_numbers = #tpu.dot_dimension_numbers<[1], [0], [0], [1], [0, 0, 1, 1], [], []>} : vector<16x4xbf16>, vector<4x72xbf16>, vector<16x72xf32> -> vector<16x72xf32>
    %46 = arith.addf %41, %45 : vector<16x72xf32>
    %47 = vector.extract_strided_slice %1 {offsets = [0, 10], sizes = [4, 72], strides = [1, 1]} : vector<4x90xbf16> to vector<4x72xbf16>
    %c8 = arith.constant 8 : index
    %c0_39 = arith.constant 0 : index
    %c0_40 = arith.constant 0 : index
    %48 = vector.load %arg3[%c8, %c0_39, %c0_40] : memref<9x16x4xbf16, #tpu.memory_space<vmem>>, vector<1x16x4xbf16>
    %49 = vector.shape_cast %48 : vector<1x16x4xbf16> to vector<16x4xbf16>
    %cst_41 = arith.constant dense<0.000000e+00> : vector<16x72xf32>
    %50 = tpu.matmul %49, %47, %cst_41 {dimension_numbers = #tpu.dot_dimension_numbers<[1], [0], [0], [1], [0, 0, 1, 1], [], []>} : vector<16x4xbf16>, vector<4x72xbf16>, vector<16x72xf32> -> vector<16x72xf32>
    %51 = arith.addf %46, %50 : vector<16x72xf32>
    %c0_42 = arith.constant 0 : index
    %c0_43 = arith.constant 0 : index
    %52 = vector.load %arg4[%c0_42, %c0_43] : memref<16x1xf32, #tpu.memory_space<vmem>>, vector<16x1xf32>
    %53 = vector.broadcast %52 : vector<16x1xf32> to vector<16x72xf32>
    %54 = arith.addf %51, %53 : vector<16x72xf32>
    %55 = arith.negf %54 : vector<16x72xf32>
    %56 = math.exp %55 : vector<16x72xf32>
    %cst_44 = arith.constant 1.000000e+00 : f32
    %57 = vector.broadcast %cst_44 : f32 to vector<16x72xf32>
    %58 = arith.addf %57, %56 : vector<16x72xf32>
    %59 = arith.divf %57, %58 : vector<16x72xf32>
    %60 = arith.mulf %54, %59 : vector<16x72xf32>
    %61 = arith.truncf %60 : vector<16x72xf32> to vector<16x72xbf16>
    %62 = vector.extract_strided_slice %61 {offsets = [0, 0], sizes = [16, 8], strides = [1, 1]} : vector<16x72xbf16> to vector<16x8xbf16>
    %c0_45 = arith.constant 0 : index
    %c0_46 = arith.constant 0 : index
    %c0_47 = arith.constant 0 : index
    %c0_48 = arith.constant 0 : index
    %63 = vector.load %arg5[%c0_45, %c0_46, %c0_47, %c0_48] : memref<1x16x8x8xbf16, #tpu.memory_space<vmem>>, vector<1x16x1x8xbf16>
    %64 = vector.shape_cast %63 : vector<1x16x1x8xbf16> to vector<16x8xbf16>
    %65 = vector.shape_cast %62 : vector<16x8xbf16> to vector<1x16x1x8xbf16>
    tpu.vector_store %arg5[%c0_45, %c0_46, %c0_47, %c0_48], %65 {strides = array<i32>} : memref<1x16x8x8xbf16, #tpu.memory_space<vmem>>, vector<1x16x1x8xbf16>,
    %66 = vector.extract_strided_slice %61 {offsets = [0, 9], sizes = [16, 8], strides = [1, 1]} : vector<16x72xbf16> to vector<16x8xbf16>
    %c0_49 = arith.constant 0 : index
    %c0_50 = arith.constant 0 : index
    %c1_51 = arith.constant 1 : index
    %c0_52 = arith.constant 0 : index
    %67 = vector.load %arg5[%c0_49, %c0_50, %c1_51, %c0_52] : memref<1x16x8x8xbf16, #tpu.memory_space<vmem>>, vector<1x16x1x8xbf16>
    %68 = vector.shape_cast %67 : vector<1x16x1x8xbf16> to vector<16x8xbf16>
    %69 = vector.shape_cast %66 : vector<16x8xbf16> to vector<1x16x1x8xbf16>
    tpu.vector_store %arg5[%c0_49, %c0_50, %c1_51, %c0_52], %69 {strides = array<i32>} : memref<1x16x8x8xbf16, #tpu.memory_space<vmem>>, vector<1x16x1x8xbf16>,
    %70 = vector.extract_strided_slice %61 {offsets = [0, 18], sizes = [16, 8], strides = [1, 1]} : vector<16x72xbf16> to vector<16x8xbf16>
    %c0_53 = arith.constant 0 : index
    %c0_54 = arith.constant 0 : index
    %c2_55 = arith.constant 2 : index
    %c0_56 = arith.constant 0 : index
    %71 = vector.load %arg5[%c0_53, %c0_54, %c2_55, %c0_56] : memref<1x16x8x8xbf16, #tpu.memory_space<vmem>>, vector<1x16x1x8xbf16>
    %72 = vector.shape_cast %71 : vector<1x16x1x8xbf16> to vector<16x8xbf16>
    %73 = vector.shape_cast %70 : vector<16x8xbf16> to vector<1x16x1x8xbf16>
    tpu.vector_store %arg5[%c0_53, %c0_54, %c2_55, %c0_56], %73 {strides = array<i32>} : memref<1x16x8x8xbf16, #tpu.memory_space<vmem>>, vector<1x16x1x8xbf16>,
    %74 = vector.extract_strided_slice %61 {offsets = [0, 27], sizes = [16, 8], strides = [1, 1]} : vector<16x72xbf16> to vector<16x8xbf16>
    %c0_57 = arith.constant 0 : index
    %c0_58 = arith.constant 0 : index
    %c3_59 = arith.constant 3 : index
    %c0_60 = arith.constant 0 : index
    %75 = vector.load %arg5[%c0_57, %c0_58, %c3_59, %c0_60] : memref<1x16x8x8xbf16, #tpu.memory_space<vmem>>, vector<1x16x1x8xbf16>
    %76 = vector.shape_cast %75 : vector<1x16x1x8xbf16> to vector<16x8xbf16>
    %77 = vector.shape_cast %74 : vector<16x8xbf16> to vector<1x16x1x8xbf16>
    tpu.vector_store %arg5[%c0_57, %c0_58, %c3_59, %c0_60], %77 {strides = array<i32>} : memref<1x16x8x8xbf16, #tpu.memory_space<vmem>>, vector<1x16x1x8xbf16>,
    %78 = vector.extract_strided_slice %61 {offsets = [0, 36], sizes = [16, 8], strides = [1, 1]} : vector<16x72xbf16> to vector<16x8xbf16>
    %c0_61 = arith.constant 0 : index
    %c0_62 = arith.constant 0 : index
    %c4_63 = arith.constant 4 : index
    %c0_64 = arith.constant 0 : index
    %79 = vector.load %arg5[%c0_61, %c0_62, %c4_63, %c0_64] : memref<1x16x8x8xbf16, #tpu.memory_space<vmem>>, vector<1x16x1x8xbf16>
    %80 = vector.shape_cast %79 : vector<1x16x1x8xbf16> to vector<16x8xbf16>
    %81 = vector.shape_cast %78 : vector<16x8xbf16> to vector<1x16x1x8xbf16>
    tpu.vector_store %arg5[%c0_61, %c0_62, %c4_63, %c0_64], %81 {strides = array<i32>} : memref<1x16x8x8xbf16, #tpu.memory_space<vmem>>, vector<1x16x1x8xbf16>,
    %82 = vector.extract_strided_slice %61 {offsets = [0, 45], sizes = [16, 8], strides = [1, 1]} : vector<16x72xbf16> to vector<16x8xbf16>
    %c0_65 = arith.constant 0 : index
    %c0_66 = arith.constant 0 : index
    %c5_67 = arith.constant 5 : index
    %c0_68 = arith.constant 0 : index
    %83 = vector.load %arg5[%c0_65, %c0_66, %c5_67, %c0_68] : memref<1x16x8x8xbf16, #tpu.memory_space<vmem>>, vector<1x16x1x8xbf16>
    %84 = vector.shape_cast %83 : vector<1x16x1x8xbf16> to vector<16x8xbf16>
    %85 = vector.shape_cast %82 : vector<16x8xbf16> to vector<1x16x1x8xbf16>
    tpu.vector_store %arg5[%c0_65, %c0_66, %c5_67, %c0_68], %85 {strides = array<i32>} : memref<1x16x8x8xbf16, #tpu.memory_space<vmem>>, vector<1x16x1x8xbf16>,
    %86 = vector.extract_strided_slice %61 {offsets = [0, 54], sizes = [16, 8], strides = [1, 1]} : vector<16x72xbf16> to vector<16x8xbf16>
    %c0_69 = arith.constant 0 : index
    %c0_70 = arith.constant 0 : index
    %c6_71 = arith.constant 6 : index
    %c0_72 = arith.constant 0 : index
    %87 = vector.load %arg5[%c0_69, %c0_70, %c6_71, %c0_72] : memref<1x16x8x8xbf16, #tpu.memory_space<vmem>>, vector<1x16x1x8xbf16>
    %88 = vector.shape_cast %87 : vector<1x16x1x8xbf16> to vector<16x8xbf16>
    %89 = vector.shape_cast %86 : vector<16x8xbf16> to vector<1x16x1x8xbf16>
    tpu.vector_store %arg5[%c0_69, %c0_70, %c6_71, %c0_72], %89 {strides = array<i32>} : memref<1x16x8x8xbf16, #tpu.memory_space<vmem>>, vector<1x16x1x8xbf16>,
    %90 = vector.extract_strided_slice %61 {offsets = [0, 63], sizes = [16, 8], strides = [1, 1]} : vector<16x72xbf16> to vector<16x8xbf16>
    %c0_73 = arith.constant 0 : index
    %c0_74 = arith.constant 0 : index
    %c7_75 = arith.constant 7 : index
    %c0_76 = arith.constant 0 : index
    %91 = vector.load %arg5[%c0_73, %c0_74, %c7_75, %c0_76] : memref<1x16x8x8xbf16, #tpu.memory_space<vmem>>, vector<1x16x1x8xbf16>
    %92 = vector.shape_cast %91 : vector<1x16x1x8xbf16> to vector<16x8xbf16>
    %93 = vector.shape_cast %90 : vector<16x8xbf16> to vector<1x16x1x8xbf16>
    tpu.vector_store %arg5[%c0_73, %c0_74, %c7_75, %c0_76], %93 {strides = array<i32>} : memref<1x16x8x8xbf16, #tpu.memory_space<vmem>>, vector<1x16x1x8xbf16>,
    return
  }
  func.func @transform_0(%arg0: i32, %arg1: i32) -> (i32, i32, i32, i32) {
    %c0_i32 = arith.constant 0 : i32
    %c0_i32_0 = arith.constant 0 : i32
    %c0_i32_1 = arith.constant 0 : i32
    %c0_i32_2 = arith.constant 0 : i32
    return %arg0, %c0_i32, %c0_i32_0, %c0_i32_1 : i32, i32, i32, i32
  }
  func.func @transform_1(%arg0: i32, %arg1: i32) -> (i32, i32, i32) {
    %c0_i32 = arith.constant 0 : i32
    %c0_i32_0 = arith.constant 0 : i32
    %c0_i32_1 = arith.constant 0 : i32
    return %c0_i32, %arg1, %c0_i32_0 : i32, i32, i32
  }
  func.func @transform_2(%arg0: i32, %arg1: i32) -> (i32, i32) {
    %c0_i32 = arith.constant 0 : i32
    %c0_i32_0 = arith.constant 0 : i32
    return %arg1, %c0_i32 : i32, i32
  }
  func.func @transform_3(%arg0: i32, %arg1: i32) -> (i32, i32, i32, i32) {
    %c0_i32 = arith.constant 0 : i32
    %c0_i32_0 = arith.constant 0 : i32
    %c0_i32_1 = arith.constant 0 : i32
    return %arg0, %arg1, %c0_i32, %c0_i32_0 : i32, i32, i32, i32
  }
}

</mosaic_0001>

<llo_original>
// kernel: tpu_custom_call.1
$region0: #{tpu_custom_call.1}
  #allocation0 [shape = 'u32[]', space=smem, size = 0x4, offset = 0x4, fixed_abs, tag = 'smem constant byte address 0x4 - core index']
  #allocation1 [shape = 'u32[72,128]{1,0:T(1,128)}', space=vmem, size = 0x9000, scoped, tag = 'internal scratch']
  %s0 = inlined_call_operand.vmem [shape: bf16[2,4,4,90], index: 0, kind: input, shape index: {}]
  %s1 = inlined_call_operand.vmem [shape: bf16[9,32,4], index: 1, kind: input, shape index: {}]
  %s2 = inlined_call_operand.vmem [shape: f32[32,1], index: 2, kind: input, shape index: {}]
  %s3 = inlined_call_operand.vmem [shape: bf16[2,32,8,8], index: 3, kind: output, shape index: {}]
  %s4 = sld [smem:[#allocation0]]
  $region86: #{tpu_custom_call.1} parent=0
    _
  %s6 = ssub.s32 1, %s4
  %s7 = scalar_select 0, %s6, %s4
  $region1: #{tpu_custom_call.1} parent=0
    #allocation2 [shape = 'u8[73728]{0}', space=vmem, size = 0x12000, scoped, tag = 'input window, operand 1']
    loop: start=0, step=1, limit=6
    $region2: #{tpu_custom_call.1} parent=1 // loop_pre_header
      _
    $region3: #{tpu_custom_call.1} parent=1 // loop_header
      %s9 = sphi 0, %s13
      %p10 = scmp.ge.s32.totalorder %s9, 6
      %s16 = sphi 0, %s28
      %s17 = sphi 0, %s24
      %s18 = sphi 0, %s16
      %s19 = sphi 0, %s17
      %s20 = sphi 0, %s18
      %s21 = sphi 0, %s19
      %s31 = sphi 0, %s33
      %s34 = sphi 0, %s31
      %s35 = sphi 0, %s34
      %s51 = sphi 0, %s35
      %s57 = sphi 0, %s59
      %s60 = sphi 0, %s57
      %s61 = sphi 0, %s60
      %s77 = sphi 0, %s61
      %s83 = sphi 0, %s85
      %s86 = sphi 0, %s83
      %s87 = sphi 0, %s86
      %s103 = sphi 0, %s87
      %s111 = sphi 0, %s113
      %s114 = sphi 0, %s111
      %s115 = sphi 0, %s114
      %s131 = sphi 0, %s115
    $region4: #{tpu_custom_call.1} parent=1 // loop_header_branch
      %12 = sbr.rel (%p10) target = $region8
    $region5: #{tpu_custom_call.1} parent=1 // loop_body
      %s14 = ssub.s32 %s9, 1
      %s15 = ssub.s32 %s9, 2
      %s22 = sadd.s32 1, %s17
      %p23 = scmp.ge.s32.totalorder %s22, 2
      %s24 = scalar_select %p23, 0, %s22
      %s25 = sadd.s32 1, %s16
      %s26 = scalar_select %p23, %s25, %s16
      %p27 = scmp.ge.s32.totalorder %s26, 2
      %s28 = scalar_select %p27, 0, %s26
      %s29 = ssub.s32 %s16, %s28
      %p30 = scmp.eq.s32.totalorder %s29, 0
      %s32 = sadd.s32 %s31, 1
      %s33 = scalar_select %p30, %s31, %s32
      %p36 = pneg %p30
      %p37 = scmp.eq.s32.totalorder %s9, 3
      %p38 = por %p36, %p37
      %p39 = scmp.ne.s32.totalorder %s31, %s34
      %p40 = scmp.eq.s32.totalorder %s9, 0
      %p41 = por %p39, %p40
      %p42 = scmp.ne.s32.totalorder %s31, %s34
      %p43 = scmp.eq.s32.totalorder %s14, 3
      %p44 = por %p42, %p43
      %p45 = scmp.ne.s32.totalorder %s34, %s35
      %p46 = scmp.eq.s32.totalorder %s14, 0
      %p47 = por %p45, %p46
      %p48 = scmp.ne.s32.totalorder %s34, %s35
      %p49 = scmp.eq.s32.totalorder %s15, 3
      %p50 = por %p48, %p49
      %p52 = scmp.ne.s32.totalorder %s35, %s51
      %p53 = scmp.eq.s32.totalorder %s15, 0
      %p54 = por %p52, %p53
      %s55 = ssub.s32 %s17, %s24
      %p56 = scmp.eq.s32.totalorder %s55, 0
      %s58 = sadd.s32 %s57, 1
      %s59 = scalar_select %p56, %s57, %s58
      %p62 = pneg %p56
      %p63 = scmp.eq.s32.totalorder %s9, 3
      %p64 = por %p62, %p63
      %p65 = scmp.ne.s32.totalorder %s57, %s60
      %p66 = scmp.eq.s32.totalorder %s9, 0
      %p67 = por %p65, %p66
      %p68 = scmp.ne.s32.totalorder %s57, %s60
      %p69 = scmp.eq.s32.totalorder %s14, 3
      %p70 = por %p68, %p69
      %p71 = scmp.ne.s32.totalorder %s60, %s61
      %p72 = scmp.eq.s32.totalorder %s14, 0
      %p73 = por %p71, %p72
      %p74 = scmp.ne.s32.totalorder %s60, %s61
      %p75 = scmp.eq.s32.totalorder %s15, 3
      %p76 = por %p74, %p75
      %p78 = scmp.ne.s32.totalorder %s61, %s77
      %p79 = scmp.eq.s32.totalorder %s15, 0
      %p80 = por %p78, %p79
      %s81 = ssub.s32 %s17, %s24
      %p82 = scmp.eq.s32.totalorder %s81, 0
      %s84 = sadd.s32 %s83, 1
      %s85 = scalar_select %p82, %s83, %s84
      %p88 = pneg %p82
      %p89 = scmp.eq.s32.totalorder %s9, 3
      %p90 = por %p88, %p89
      %p91 = scmp.ne.s32.totalorder %s83, %s86
      %p92 = scmp.eq.s32.totalorder %s9, 0
      %p93 = por %p91, %p92
      %p94 = scmp.ne.s32.totalorder %s83, %s86
      %p95 = scmp.eq.s32.totalorder %s14, 3
      %p96 = por %p94, %p95
      %p97 = scmp.ne.s32.totalorder %s86, %s87
      %p98 = scmp.eq.s32.totalorder %s14, 0
      %p99 = por %p97, %p98
      %p100 = scmp.ne.s32.totalorder %s86, %s87
      %p101 = scmp.eq.s32.totalorder %s15, 3
      %p102 = por %p100, %p101
      %p104 = scmp.ne.s32.totalorder %s87, %s103
      %p105 = scmp.eq.s32.totalorder %s15, 0
      %p106 = por %p104, %p105
      %s107 = ssub.s32 %s16, %s28
      %s108 = ssub.s32 %s17, %s24
      %s109 = sor.u32 %s107, %s108
      %p110 = scmp.eq.s32.totalorder %s109, 0
      %s112 = sadd.s32 %s111, 1
      %s113 = scalar_select %p110, %s111, %s112
      %p116 = pneg %p110
      %p117 = scmp.eq.s32.totalorder %s9, 3
      %p118 = por %p116, %p117
      %p119 = scmp.ne.s32.totalorder %s111, %s114
      %p120 = scmp.eq.s32.totalorder %s9, 0
      %p121 = por %p119, %p120
      %p122 = scmp.ne.s32.totalorder %s111, %s114
      %p123 = scmp.eq.s32.totalorder %s14, 3
      %p124 = por %p122, %p123
      %p125 = scmp.ne.s32.totalorder %s114, %s115
      %p126 = scmp.eq.s32.totalorder %s14, 0
      %p127 = por %p125, %p126
      %p128 = scmp.ne.s32.totalorder %s114, %s115
      %p129 = scmp.eq.s32.totalorder %s15, 3
      %p130 = por %p128, %p129
      %p132 = scmp.ne.s32.totalorder %s115, %s131
      %p133 = scmp.eq.s32.totalorder %s15, 0
      %p134 = por %p132, %p133
      %p135 = scmp.le.s32.totalorder 1, %s9
      %p136 = scmp.lt.s32.totalorder %s9, 5
      %p137 = pnand %p135, %p136
      %p138 = pneg %p137
      // Predicated region
      $region9: #{tpu_custom_call.1} parent=5 // pred_check
        _
      $region10: #{tpu_custom_call.1} parent=5 // pred_check_branch
        %140 = sbr.rel (%p137) target = $region12
      $region11: #{tpu_custom_call.1} parent=5 // pred_region
        %s141 = ssub.s32 %s9, 1
      $region12: #{tpu_custom_call.1} parent=5 // pred_fallthru
        _
      %p142 = scmp.lt.s32.totalorder %s9, 4
      // Predicated region
      $region13: #{tpu_custom_call.1} parent=5 // pred_check
        %p143 = pneg %p142
      $region14: #{tpu_custom_call.1} parent=5 // pred_check_branch
        %145 = sbr.rel (%p143) target = $region16
      $region15: #{tpu_custom_call.1} parent=5 // pred_region
        // Predicated region
        $region17: #{tpu_custom_call.1} parent=15 // pred_check
          %p146 = pneg %p41
        $region18: #{tpu_custom_call.1} parent=15 // pred_check_branch
          %148 = sbr.rel (%p146) target = $region20
        $region19: #{tpu_custom_call.1} parent=15 // pred_region
          %p149 = scmp.lt.s32.totalorder %s16, 1
          %s150 = scalar_select %p149, %s16, 1
          %s151 = smul.addr %s150, 4
          %s152 = smul.addr %s151, 2
          %s153 = scalar_lea.vmem %s0, %s152
        $region20: #{tpu_custom_call.1} parent=15 // pred_fallthru
          _
        // Predicated region
        $region21: #{tpu_custom_call.1} parent=15 // pred_check
          %p154 = pneg %p67
        $region22: #{tpu_custom_call.1} parent=15 // pred_check_branch
          %156 = sbr.rel (%p154) target = $region24
        $region23: #{tpu_custom_call.1} parent=15 // pred_region
          %s157 = sand.u32 %s57, 1
          %s158 = sand.u32 %s57, 1
          %s159 = smul.addr %s158, 72
          %s160 = scalar_lea.vmem [#allocation2], %s159
          %s161 = smul.u32 2, %s17
          %s162 = smul.addr %s161, 4
          %s163 = scalar_lea.vmem %s1, %s162
          // Predicated region
          $region25: #{tpu_custom_call.1} parent=23 // pred_check
            _
          $region26: #{tpu_custom_call.1} parent=23 // pred_check_branch
            %165 = sbr.rel (0) target = $region28
          $region27: #{tpu_custom_call.1} parent=23 // pred_region
            // Predicated region
            $region29: #{tpu_custom_call.1} parent=27 // pred_check
              _
            $region30: #{tpu_custom_call.1} parent=27 // pred_check_branch
              %167 = sbr.rel target = $region32
            $region31: #{tpu_custom_call.1} parent=27 // pred_region
              // Predicated region
              $region44: #{tpu_custom_call.1} parent=31 // pred_check
                _
              $region45: #{tpu_custom_call.1} parent=31 // pred_check_branch
                %217 = sbr.rel (0) target = $region47
              $region46: #{tpu_custom_call.1} parent=31 // pred_region
                loop: start=0, step=1, limit=1
                $region48: #{tpu_custom_call.1} parent=46 // loop_pre_header
                  _
                $region49: #{tpu_custom_call.1} parent=46 // loop_header
                  %s219 = sphi 0, %s223
                  %p220 = scmp.ge.s32.totalorder %s219, 1
                  %s224 = sphi %s163, %s163
                  %s225 = sphi %s160, %s160
                $region50: #{tpu_custom_call.1} parent=46 // loop_header_branch
                  %222 = sbr.rel (%p220) target = $region54
                $region51: #{tpu_custom_call.1} parent=46 // loop_body
                  _
                $region52: #{tpu_custom_call.1} parent=46 // loop_footer
                  %s223 = sadd.s32 1, %s219
                $region53: #{tpu_custom_call.1} parent=46 // loop_footer_branch
                  %218 = sbr.rel target = $region49
                $region54: #{tpu_custom_call.1} parent=46 // loop_exit
                  _
                %s227 = ssub.s32 16, 1
                loop: start=0, step=1, limit=1
                $region55: #{tpu_custom_call.1} parent=46 // loop_pre_header
                  _
                $region56: #{tpu_custom_call.1} parent=46 // loop_header
                  %s229 = sphi 0, %s233
                  %p230 = scmp.ge.s32.totalorder %s229, 1
                  %s234 = sphi %s163, %s163
                  %s235 = sphi %s160, %s160
                $region57: #{tpu_custom_call.1} parent=46 // loop_header_branch
                  %232 = sbr.rel (%p230) target = $region61
                $region58: #{tpu_custom_call.1} parent=46 // loop_body
                  %v236 = vld [vmem:[%s234] sm:%s227]
                  %237 = vst [vmem:[%s235] sm:%s227] %v236
                  %v238 = vld [vmem:[%s234 + $0x4] sm:%s227]
                  %239 = vst [vmem:[%s235 + $0x4] sm:%s227] %v238
                  %v240 = vld [vmem:[%s234 + $0x10] sm:%s227]
                  %241 = vst [vmem:[%s235 + $0x8] sm:%s227] %v240
                  %v242 = vld [vmem:[%s234 + $0x14] sm:%s227]
                  %243 = vst [vmem:[%s235 + $0xc] sm:%s227] %v242
                  %v244 = vld [vmem:[%s234 + $0x20] sm:%s227]
                  %245 = vst [vmem:[%s235 + $0x10] sm:%s227] %v244
                  %v246 = vld [vmem:[%s234 + $0x24] sm:%s227]
                  %247 = vst [vmem:[%s235 + $0x14] sm:%s227] %v246
                  %v248 = vld [vmem:[%s234 + $0x30] sm:%s227]
                  %249 = vst [vmem:[%s235 + $0x18] sm:%s227] %v248
                  %v250 = vld [vmem:[%s234 + $0x34] sm:%s227]
                  %251 = vst [vmem:[%s235 + $0x1c] sm:%s227] %v250
                  %v252 = vld [vmem:[%s234 + $0x40] sm:%s227]
                  %253 = vst [vmem:[%s235 + $0x20] sm:%s227] %v252
                  %v254 = vld [vmem:[%s234 + $0x44] sm:%s227]
                  %255 = vst [vmem:[%s235 + $0x24] sm:%s227] %v254
                  %v256 = vld [vmem:[%s234 + $0x50] sm:%s227]
                  %257 = vst [vmem:[%s235 + $0x28] sm:%s227] %v256
                  %v258 = vld [vmem:[%s234 + $0x54] sm:%s227]
                  %259 = vst [vmem:[%s235 + $0x2c] sm:%s227] %v258
                  %v260 = vld [vmem:[%s234 + $0x60] sm:%s227]
                  %261 = vst [vmem:[%s235 + $0x30] sm:%s227] %v260
                  %v262 = vld [vmem:[%s234 + $0x64] sm:%s227]
                  %263 = vst [vmem:[%s235 + $0x34] sm:%s227] %v262
                  %v264 = vld [vmem:[%s234 + $0x70] sm:%s227]
                  %265 = vst [vmem:[%s235 + $0x38] sm:%s227] %v264
                  %v266 = vld [vmem:[%s234 + $0x74] sm:%s227]
                  %267 = vst [vmem:[%s235 + $0x3c] sm:%s227] %v266
                  %v268 = vld [vmem:[%s234 + $0x80] sm:%s227]
                  %269 = vst [vmem:[%s235 + $0x40] sm:%s227] %v268
                  %v270 = vld [vmem:[%s234 + $0x84] sm:%s227]
                  %271 = vst [vmem:[%s235 + $0x44] sm:%s227] %v270
                $region59: #{tpu_custom_call.1} parent=46 // loop_footer
                  %s233 = sadd.s32 1, %s229
                $region60: #{tpu_custom_call.1} parent=46 // loop_footer_branch
                  %228 = sbr.rel target = $region56
                $region61: #{tpu_custom_call.1} parent=46 // loop_exit
                  _
              $region47: #{tpu_custom_call.1} parent=31 // pred_fallthru
                _
            $region32: #{tpu_custom_call.1} parent=27 // pred_fallthru
              _
            // Predicated region
            $region33: #{tpu_custom_call.1} parent=27 // pred_check
              _
            $region34: #{tpu_custom_call.1} parent=27 // pred_check_branch
              %169 = sbr.rel (0) target = $region36
            $region35: #{tpu_custom_call.1} parent=27 // pred_region
              %s171 = ssub.s32 16, 1
              loop: start=0, step=1, limit=1
              $region37: #{tpu_custom_call.1} parent=35 // loop_pre_header
                _
              $region38: #{tpu_custom_call.1} parent=35 // loop_header
                %s173 = sphi 0, %s177
                %p174 = scmp.ge.s32.totalorder %s173, 1
                %s178 = sphi %s163, %s163
                %s179 = sphi %s160, %s160
              $region39: #{tpu_custom_call.1} parent=35 // loop_header_branch
                %176 = sbr.rel (%p174) target = $region43
              $region40: #{tpu_custom_call.1} parent=35 // loop_body
                %v180 = vld [vmem:[%s178] sm:%s171]
                %181 = vst [vmem:[%s179] sm:%s171] %v180
                %v182 = vld [vmem:[%s178 + $0x4] sm:%s171]
                %183 = vst [vmem:[%s179 + $0x4] sm:%s171] %v182
                %v184 = vld [vmem:[%s178 + $0x10] sm:%s171]
                %185 = vst [vmem:[%s179 + $0x8] sm:%s171] %v184
                %v186 = vld [vmem:[%s178 + $0x14] sm:%s171]
                %187 = vst [vmem:[%s179 + $0xc] sm:%s171] %v186
                %v188 = vld [vmem:[%s178 + $0x20] sm:%s171]
                %189 = vst [vmem:[%s179 + $0x10] sm:%s171] %v188
                %v190 = vld [vmem:[%s178 + $0x24] sm:%s171]
                %191 = vst [vmem:[%s179 + $0x14] sm:%s171] %v190
                %v192 = vld [vmem:[%s178 + $0x30] sm:%s171]
                %193 = vst [vmem:[%s179 + $0x18] sm:%s171] %v192
                %v194 = vld [vmem:[%s178 + $0x34] sm:%s171]
                %195 = vst [vmem:[%s179 + $0x1c] sm:%s171] %v194
                %v196 = vld [vmem:[%s178 + $0x40] sm:%s171]
                %197 = vst [vmem:[%s179 + $0x20] sm:%s171] %v196
                %v198 = vld [vmem:[%s178 + $0x44] sm:%s171]
                %199 = vst [vmem:[%s179 + $0x24] sm:%s171] %v198
                %v200 = vld [vmem:[%s178 + $0x50] sm:%s171]
                %201 = vst [vmem:[%s179 + $0x28] sm:%s171] %v200
                %v202 = vld [vmem:[%s178 + $0x54] sm:%s171]
                %203 = vst [vmem:[%s179 + $0x2c] sm:%s171] %v202
                %v204 = vld [vmem:[%s178 + $0x60] sm:%s171]
                %205 = vst [vmem:[%s179 + $0x30] sm:%s171] %v204
                %v206 = vld [vmem:[%s178 + $0x64] sm:%s171]
                %207 = vst [vmem:[%s179 + $0x34] sm:%s171] %v206
                %v208 = vld [vmem:[%s178 + $0x70] sm:%s171]
                %209 = vst [vmem:[%s179 + $0x38] sm:%s171] %v208
                %v210 = vld [vmem:[%s178 + $0x74] sm:%s171]
                %211 = vst [vmem:[%s179 + $0x3c] sm:%s171] %v210
                %v212 = vld [vmem:[%s178 + $0x80] sm:%s171]
                %213 = vst [vmem:[%s179 + $0x40] sm:%s171] %v212
                %v214 = vld [vmem:[%s178 + $0x84] sm:%s171]
                %215 = vst [vmem:[%s179 + $0x44] sm:%s171] %v214
              $region41: #{tpu_custom_call.1} parent=35 // loop_footer
                %s177 = sadd.s32 1, %s173
              $region42: #{tpu_custom_call.1} parent=35 // loop_footer_branch
                %172 = sbr.rel target = $region38
              $region43: #{tpu_custom_call.1} parent=35 // loop_exit
                _
            $region36: #{tpu_custom_call.1} parent=27 // pred_fallthru
              _
          $region28: #{tpu_custom_call.1} parent=23 // pred_fallthru
            _
          %272 = vnop
        $region24: #{tpu_custom_call.1} parent=15 // pred_fallthru
          _
        // Predicated region
        $region62: #{tpu_custom_call.1} parent=15 // pred_check
          %p273 = pneg %p93
        $region63: #{tpu_custom_call.1} parent=15 // pred_check_branch
          %275 = sbr.rel (%p273) target = $region65
        $region64: #{tpu_custom_call.1} parent=15 // pred_region
          %s276 = smul.u32 2, %s17
          %p277 = scmp.lt.s32.totalorder %s276, 3
          %s278 = scalar_select %p277, %s276, 3
          %s279 = smul.addr %s278, 8
          %s280 = scalar_lea.vmem %s2, %s279
          %s281 = smul.u32 2, %s17
        $region65: #{tpu_custom_call.1} parent=15 // pred_fallthru
          _
      $region16: #{tpu_custom_call.1} parent=5 // pred_fallthru
        _
      %p282 = scmp.le.s32.totalorder 1, %s9
      %p283 = scmp.lt.s32.totalorder %s9, 5
      %p284 = pnand %p282, %p283
      %p285 = pneg %p284
      // Predicated region
      $region66: #{tpu_custom_call.1} parent=5 // pred_check
        _
      $region67: #{tpu_custom_call.1} parent=5 // pred_check_branch
        %287 = sbr.rel (%p284) target = $region69
      $region68: #{tpu_custom_call.1} parent=5 // pred_region
        %s288 = ssub.s32 %s9, 1
        %s289 = sand.u32 %s60, 1
        %s290 = sand.u32 %s60, 1
        %s291 = smul.addr %s290, 72
        %s292 = scalar_lea.vmem [#allocation2], %s291
        // Predicated region
        $region70: #{tpu_custom_call.1} parent=68 // pred_check
          %p293 = pneg %p73
        $region71: #{tpu_custom_call.1} parent=68 // pred_check_branch
          %295 = sbr.rel (%p293) target = $region73
        $region72: #{tpu_custom_call.1} parent=68 // pred_region
          _
        $region73: #{tpu_custom_call.1} parent=68 // pred_fallthru
          _
        %p296 = scmp.lt.s32.totalorder %s18, 1
        %s297 = scalar_select %p296, %s18, 1
        %s298 = smul.addr %s297, 4
        %s299 = smul.addr %s298, 2
        %s300 = scalar_lea.vmem %s0, %s299
        %p301 = pneg %p47
        %p302 = pneg %p44
        %s303 = sand.u32 %s60, 1
        %s304 = sand.u32 %s60, 1
        %s305 = smul.addr %s304, 72
        %s306 = scalar_lea.vmem [#allocation2], %s305
        %p307 = pneg %p73
        %p308 = pneg %p70
        %s309 = smul.u32 2, %s19
        %p310 = scmp.lt.s32.totalorder %s309, 3
        %s311 = scalar_select %p310, %s309, 3
        %s312 = smul.addr %s311, 8
        %s313 = scalar_lea.vmem %s2, %s312
        %p314 = pneg %p99
        %p315 = pneg %p96
        %p316 = pneg %p127
        %p317 = pneg %p124
        %s318 = smul.u32 16, %s19
        %p319 = scmp.lt.s32.totalorder %s18, 1
        %s320 = scalar_select %p319, %s18, 1
        %p321 = scmp.lt.s32.totalorder %s318, 31
        %s322 = scalar_select %p321, %s318, 31
        %s323 = smul.addr %s320, 32
        %s324 = sadd.s32 %s322, %s323
        %s325 = smul.addr %s324, 4
        %s326 = scalar_lea.vmem %s3, %s325
        %p327 = scmp.lt.s32.totalorder %s18, 1
        %s328 = scalar_select %p327, %s18, 1
        %s329 = smul.addr %s328, 4
        %s330 = smul.addr %s329, 2
        %s331 = scalar_lea.vmem %s0, %s330
        %s332 = smul.u32 2, %s19
        %s333 = smul.u32 2, %s19
        %p334 = scmp.lt.s32.totalorder %s333, 3
        %s335 = scalar_select %p334, %s333, 3
        %s336 = smul.addr %s335, 8
        %s337 = scalar_lea.vmem %s2, %s336
        %s338 = smul.u32 2, %s19
        %s339 = smul.u32 16, %s19
        %p340 = scmp.lt.s32.totalorder %s18, 1
        %s341 = scalar_select %p340, %s18, 1
        %p342 = scmp.lt.s32.totalorder %s339, 31
        %s343 = scalar_select %p342, %s339, 31
        %s344 = smul.addr %s341, 32
        %s345 = sadd.s32 %s343, %s344
        %s346 = smul.addr %s345, 4
        %s347 = scalar_lea.vmem %s3, %s346
        %s348 = smul.u32 16, %s19
        %v350 = vld [vmem:[%s331] sm:$0x3]
        %s351 = scalar_lea.vmem %s331, 2
        %v352 = vld [vmem:[%s351] sm:$0x3]
        %s353 = scalar_lea.vmem %s331, 4
        %v354 = vld [vmem:[%s353] sm:$0x3]
        %s355 = scalar_lea.vmem %s331, 6
        %v356 = vld [vmem:[%s355] sm:$0x3]
        %v357 = vld [vmem:[%s292] sm:$0xf]
        %v358 = vld [vmem:[%s292 + $0x4] sm:$0xf]
        %s359 = scalar_lea.vmem %s292, 8 [#allocation2]
        %v360 = vld [vmem:[%s359] sm:$0xf]
        %v361 = vld [vmem:[%s359 + $0x4] sm:$0xf]
        %v364 = vunpack.c.l.b16 %v360
        %v365 = vunpack.c.l.b16 %v361
        %v366 = vpack.c.b16 %v365, %v364
        %vm367 = vcmask 31744
        %v369 = vsel %vm367, %v366, 0
        %vm371 = vcmask 1041408
        %v373 = vsel %vm371, %v352, 0
        %375 = vmatpush.bf16.msra.mxu0 0
        %376 = vmatpush.bf16.msra.mxu0 0
        %377 = vmatpush.bf16.msra.mxu0 0
        %378 = vmatpush.bf16.msra.mxu0 0
        %379 = vmatpush.bf16.msra.mxu0 0
        %380 = vmatpush.bf16.msra.mxu0 0
        %381 = vmatpush.bf16.msra.mxu0 0
        %382 = vmatpush.bf16.msra.mxu0 %v373
        %383 = vmatmul.bf16.gmra.mxu0 %v369
        %v384 = vpop.f32.mrf.mxu0
        %v385 = vadd.f32 0.0, %v384
        %v386 = vpop.f32.mrf.mxu0
        %v387 = vadd.f32 0.0, %v386
        %388 = vdwg.mxu0
        %v391 = vunpack.c.l.b16 %v357
        %v392 = vunpack.c.l.b16 %v358
        %v393 = vpack.c.b16 %v392, %v391
        %v395 = vsel %vm367, %v393, 0
        %v398 = vsel %vm371, %v350, 0
        %400 = vmatpush.bf16.msra.mxu0 0
        %401 = vmatpush.bf16.msra.mxu0 0
        %402 = vmatpush.bf16.msra.mxu0 0
        %403 = vmatpush.bf16.msra.mxu0 0
        %404 = vmatpush.bf16.msra.mxu0 0
        %405 = vmatpush.bf16.msra.mxu0 0
        %406 = vmatpush.bf16.msra.mxu0 0
        %407 = vmatpush.bf16.msra.mxu0 %v398
        %408 = vmatmul.bf16.gmra.mxu0 %v395
        %v409 = vpop.f32.mrf.mxu0
        %v410 = vadd.f32 %v385, %v409
        %v411 = vpop.f32.mrf.mxu0
        %v412 = vadd.f32 %v387, %v411
        %413 = vdwg.mxu0
        %s414 = scalar_lea.vmem %s292, 16 [#allocation2]
        %v415 = vld [vmem:[%s414] sm:$0xf]
        %v416 = vld [vmem:[%s414 + $0x4] sm:$0xf]
        %v419 = vunpack.c.l.b16 %v415
        %v420 = vunpack.c.l.b16 %v416
        %v421 = vpack.c.b16 %v420, %v419
        %422 = vst [vmem:[#allocation1] ss:$4 sm:$0xff] %v350
        %v423 = vld.sshfl [vmem:[#allocation1] sm:$0xff pattern:$0x73625140]
        %425 = vrot.lane.b32.xlu0 %v423, 127
        %v426 = vpop.permute.xlu0 %425
        %v428 = vsel %vm367, %v421, 0
        %v431 = vsel %vm371, %v426, 0
        %433 = vmatpush.bf16.msra.mxu0 0
        %434 = vmatpush.bf16.msra.mxu0 0
        %435 = vmatpush.bf16.msra.mxu0 0
        %436 = vmatpush.bf16.msra.mxu0 0
        %437 = vmatpush.bf16.msra.mxu0 0
        %438 = vmatpush.bf16.msra.mxu0 0
        %439 = vmatpush.bf16.msra.mxu0 0
        %440 = vmatpush.bf16.msra.mxu0 %v431
        %441 = vmatmul.bf16.gmra.mxu0 %v428
        %v442 = vpop.f32.mrf.mxu0
        %v443 = vadd.f32 0.0, %v442
        %v444 = vpop.f32.mrf.mxu0
        %v445 = vadd.f32 0.0, %v444
        %446 = vdwg.mxu0
        %v447 = vadd.f32 %v410, %v443
        %v448 = vadd.f32 %v412, %v445
        %s449 = scalar_lea.vmem %s292, 24 [#allocation2]
        %v450 = vld [vmem:[%s449] sm:$0xf]
        %v451 = vld [vmem:[%s449 + $0x4] sm:$0xf]
        %v454 = vunpack.c.l.b16 %v450
        %v455 = vunpack.c.l.b16 %v451
        %v456 = vpack.c.b16 %v455, %v454
        %v458 = vsel %vm367, %v456, 0
        %v461 = vsel %vm371, %v354, 0
        %463 = vmatpush.bf16.msra.mxu0 0
        %464 = vmatpush.bf16.msra.mxu0 0
        %465 = vmatpush.bf16.msra.mxu0 0
        %466 = vmatpush.bf16.msra.mxu0 0
        %467 = vmatpush.bf16.msra.mxu0 0
        %468 = vmatpush.bf16.msra.mxu0 0
        %469 = vmatpush.bf16.msra.mxu0 0
        %470 = vmatpush.bf16.msra.mxu0 %v461
        %471 = vmatmul.bf16.gmra.mxu0 %v458
        %v472 = vpop.f32.mrf.mxu0
        %v473 = vadd.f32 0.0, %v472
        %v474 = vpop.f32.mrf.mxu0
        %v475 = vadd.f32 0.0, %v474
        %476 = vdwg.mxu0
        %v477 = vadd.f32 %v447, %v473
        %v478 = vadd.f32 %v448, %v475
        %s479 = scalar_lea.vmem %s292, 32 [#allocation2]
        %v480 = vld [vmem:[%s479] sm:$0xf]
        %v481 = vld [vmem:[%s479 + $0x4] sm:$0xf]
        %v484 = vunpack.c.l.b16 %v480
        %v485 = vunpack.c.l.b16 %v481
        %v486 = vpack.c.b16 %v485, %v484
        %v488 = vsel %vm367, %v486, 0
        %v491 = vsel %vm371, %v356, 0
        %493 = vmatpush.bf16.msra.mxu0 0
        %494 = vmatpush.bf16.msra.mxu0 0
        %495 = vmatpush.bf16.msra.mxu0 0
        %496 = vmatpush.bf16.msra.mxu0 0
        %497 = vmatpush.bf16.msra.mxu0 0
        %498 = vmatpush.bf16.msra.mxu0 0
        %499 = vmatpush.bf16.msra.mxu0 0
        %500 = vmatpush.bf16.msra.mxu0 %v491
        %501 = vmatmul.bf16.gmra.mxu0 %v488
        %v502 = vpop.f32.mrf.mxu0
        %v503 = vadd.f32 0.0, %v502
        %v504 = vpop.f32.mrf.mxu0
        %v505 = vadd.f32 0.0, %v504
        %506 = vdwg.mxu0
        %v507 = vadd.f32 %v477, %v503
        %v508 = vadd.f32 %v478, %v505
        %s509 = scalar_lea.vmem %s292, 40 [#allocation2]
        %v510 = vld [vmem:[%s509] sm:$0xf]
        %v511 = vld [vmem:[%s509 + $0x4] sm:$0xf]
        %v514 = vunpack.c.l.b16 %v510
        %v515 = vunpack.c.l.b16 %v511
        %v516 = vpack.c.b16 %v515, %v514
        %517 = vst [vmem:[#allocation1] ss:$4 sm:$0xff] %v354
        %v518 = vld.sshfl [vmem:[#allocation1] sm:$0xff pattern:$0x73625140]
        %520 = vrot.lane.b32.xlu0 %v518, 127
        %v521 = vpop.permute.xlu0 %520
        %v523 = vsel %vm367, %v516, 0
        %v526 = vsel %vm371, %v521, 0
        %528 = vmatpush.bf16.msra.mxu0 0
        %529 = vmatpush.bf16.msra.mxu0 0
        %530 = vmatpush.bf16.msra.mxu0 0
        %531 = vmatpush.bf16.msra.mxu0 0
        %532 = vmatpush.bf16.msra.mxu0 0
        %533 = vmatpush.bf16.msra.mxu0 0
        %534 = vmatpush.bf16.msra.mxu0 0
        %535 = vmatpush.bf16.msra.mxu0 %v526
        %536 = vmatmul.bf16.gmra.mxu0 %v523
        %v537 = vpop.f32.mrf.mxu0
        %v538 = vadd.f32 0.0, %v537
        %v539 = vpop.f32.mrf.mxu0
        %v540 = vadd.f32 0.0, %v539
        %541 = vdwg.mxu0
        %v542 = vadd.f32 %v507, %v538
        %v543 = vadd.f32 %v508, %v540
        %s544 = scalar_lea.vmem %s292, 48 [#allocation2]
        %v545 = vld [vmem:[%s544] sm:$0xf]
        %v546 = vld [vmem:[%s544 + $0x4] sm:$0xf]
        %v549 = vunpack.c.l.b16 %v545
        %v550 = vunpack.c.l.b16 %v546
        %v551 = vpack.c.b16 %v550, %v549
        %552 = vst [vmem:[#allocation1] ss:$4 sm:$0xff] %v350
        %v553 = vld.sshfl [vmem:[#allocation1] sm:$0xff pattern:$0x73625140]
        %555 = vrot.lane.b32.xlu0 %v553, 119
        %v556 = vpop.permute.xlu0 %555
        %v558 = vsel %vm367, %v551, 0
        %v561 = vsel %vm371, %v556, 0
        %563 = vmatpush.bf16.msra.mxu0 0
        %564 = vmatpush.bf16.msra.mxu0 0
        %565 = vmatpush.bf16.msra.mxu0 0
        %566 = vmatpush.bf16.msra.mxu0 0
        %567 = vmatpush.bf16.msra.mxu0 0
        %568 = vmatpush.bf16.msra.mxu0 0
        %569 = vmatpush.bf16.msra.mxu0 0
        %570 = vmatpush.bf16.msra.mxu0 %v561
        %571 = vmatmul.bf16.gmra.mxu0 %v558
        %v572 = vpop.f32.mrf.mxu0
        %v573 = vadd.f32 0.0, %v572
        %v574 = vpop.f32.mrf.mxu0
        %v575 = vadd.f32 0.0, %v574
        %576 = vdwg.mxu0
        %v577 = vadd.f32 %v542, %v573
        %v578 = vadd.f32 %v543, %v575
        %s579 = scalar_lea.vmem %s292, 56 [#allocation2]
        %v580 = vld [vmem:[%s579] sm:$0xf]
        %v581 = vld [vmem:[%s579 + $0x4] sm:$0xf]
        %v584 = vunpack.c.l.b16 %v580
        %v585 = vunpack.c.l.b16 %v581
        %v586 = vpack.c.b16 %v585, %v584
        %587 = vst [vmem:[#allocation1] ss:$4 sm:$0xff] %v352
        %v588 = vld.sshfl [vmem:[#allocation1] sm:$0xff pattern:$0x73625140]
        %590 = vrot.lane.b32.xlu0 %v588, 119
        %v591 = vpop.permute.xlu0 %590
        %v593 = vsel %vm367, %v586, 0
        %v596 = vsel %vm371, %v591, 0
        %598 = vmatpush.bf16.msra.mxu0 0
        %599 = vmatpush.bf16.msra.mxu0 0
        %600 = vmatpush.bf16.msra.mxu0 0
        %601 = vmatpush.bf16.msra.mxu0 0
        %602 = vmatpush.bf16.msra.mxu0 0
        %603 = vmatpush.bf16.msra.mxu0 0
        %604 = vmatpush.bf16.msra.mxu0 0
        %605 = vmatpush.bf16.msra.mxu0 %v596
        %606 = vmatmul.bf16.gmra.mxu0 %v593
        %v607 = vpop.f32.mrf.mxu0
        %v608 = vadd.f32 0.0, %v607
        %v609 = vpop.f32.mrf.mxu0
        %v610 = vadd.f32 0.0, %v609
        %611 = vdwg.mxu0
        %v612 = vadd.f32 %v577, %v608
        %v613 = vadd.f32 %v578, %v610
        %s614 = scalar_lea.vmem %s292, 64 [#allocation2]
        %v615 = vld [vmem:[%s614] sm:$0xf]
        %v616 = vld [vmem:[%s614 + $0x4] sm:$0xf]
        %v619 = vunpack.c.l.b16 %v615
        %v620 = vunpack.c.l.b16 %v616
        %v621 = vpack.c.b16 %v620, %v619
        %622 = vst [vmem:[#allocation1] ss:$4 sm:$0xff] %v350
        %v623 = vld.sshfl [vmem:[#allocation1] sm:$0xff pattern:$0x73625140]
        %625 = vrot.lane.b32.xlu0 %v623, 118
        %v626 = vpop.permute.xlu0 %625
        %v628 = vsel %vm367, %v621, 0
        %v631 = vsel %vm371, %v626, 0
        %633 = vmatpush.bf16.msra.mxu0 0
        %634 = vmatpush.bf16.msra.mxu0 0
        %635 = vmatpush.bf16.msra.mxu0 0
        %636 = vmatpush.bf16.msra.mxu0 0
        %637 = vmatpush.bf16.msra.mxu0 0
        %638 = vmatpush.bf16.msra.mxu0 0
        %639 = vmatpush.bf16.msra.mxu0 0
        %640 = vmatpush.bf16.msra.mxu0 %v631
        %641 = vmatmul.bf16.gmra.mxu0 %v628
        %v642 = vpop.f32.mrf.mxu0
        %v643 = vadd.f32 0.0, %v642
        %v644 = vpop.f32.mrf.mxu0
        %v645 = vadd.f32 0.0, %v644
        %646 = vdwg.mxu0
        %v647 = vadd.f32 %v612, %v643
        %v648 = vadd.f32 %v613, %v645
        %v649 = vld [vmem:[%s337] sm:$0xff]
        %v650 = vld [vmem:[%s337 + $0x8] sm:$0xff]
        %652 = vset.pattern.permute.xlu0 0
        %653 = vperm.xlu0 %652, %v649
        %v654 = vpop.permute.xlu0 %653
        %657 = vset.pattern.permute.xlu0 0
        %658 = vperm.xlu0 %657, %v650
        %v659 = vpop.permute.xlu0 %658
        %v661 = vadd.f32 %v647, %v654
        %v662 = vadd.f32 %v648, %v659
        %v663 = vxor.u32 %v661, 2147483648
        %v664 = vxor.u32 %v662, 2147483648
        %v665 = vmul.f32 %v663, 1.442695
        %v666 = vpow.pop %v665
        %v667 = vmul.f32 %v664, 1.442695
        %v668 = vpow.pop %v667
        %v669 = vadd.f32 %v666, 1.0
        %v670 = vadd.f32 %v668, 1.0
        %v671 = vrcp.pop %v669
        %v672 = vmul.f32 %v669, %v671
        %v673 = vsub.f32 1.0, %v672
        %v674 = vmul.f32 %v671, %v673
        %v675 = vadd.f32 %v671, %v674
        %vm676 = vweird.f32 %v669
        %vm677 = vweird.f32 %v671
        %vm678 = vmor %vm676, %vm677
        %v679 = vsel %vm678, %v671, %v675
        %v680 = vand.u32 2147483647, %v669
        %vm681 = vcmp.eq.f32.partialorder %v680, 8.507059e+37
        %v682 = vand.u32 %v669, 2147483648
        %v683 = vor.u32 1.1754944e-38, %v682
        %v684 = vsel %vm681, %v683, %v679
        %v685 = vmul.f32 1.0, %v684
        %v686 = vrcp.pop %v670
        %v687 = vmul.f32 %v670, %v686
        %v688 = vsub.f32 1.0, %v687
        %v689 = vmul.f32 %v686, %v688
        %v690 = vadd.f32 %v686, %v689
        %vm691 = vweird.f32 %v670
        %vm692 = vweird.f32 %v686
        %vm693 = vmor %vm691, %vm692
        %v694 = vsel %vm693, %v686, %v690
        %v695 = vand.u32 2147483647, %v670
        %vm696 = vcmp.eq.f32.partialorder %v695, 8.507059e+37
        %v697 = vand.u32 %v670, 2147483648
        %v698 = vor.u32 1.1754944e-38, %v697
        %v699 = vsel %vm696, %v698, %v694
        %v700 = vmul.f32 1.0, %v699
        %v701 = vmul.f32 %v661, %v685
        %v702 = vmul.f32 %v662, %v700
        %v703 = vpack.c.bf16 %v701, %v701
        %v704 = vpack.c.bf16 %v702, %v702
        %v707 = vrot.slane %v703, 3
        %v708 = vrot.slane %v704, 3
        %vm709 = vcmask 1040384
        %v712 = vsel %vm709, %v703, %v707
        %vm714 = vcmask 1041409
        %v715 = vsel %vm714, %v703, %v707
        %v717 = vrot.slane %v715, 1
        %vm718 = vcmask 1042434
        %v719 = vsel %vm718, %v703, %v707
        %v721 = vrot.slane %v719, 2
        %vm722 = vcmask 1043459
        %v723 = vsel %vm722, %v703, %v707
        %v725 = vrot.slane %v723, 3
        %v728 = vsel %vm709, %v704, %v708
        %v730 = vsel %vm714, %v704, %v708
        %v732 = vrot.slane %v730, 1
        %v733 = vsel %vm718, %v704, %v708
        %v735 = vrot.slane %v733, 2
        %v736 = vsel %vm722, %v704, %v708
        %v738 = vrot.slane %v736, 3
        %v739 = vunpack.i.l.s16 %v712
        %v740 = vunpack.i.h.s16 %v712
        %v741 = vunpack.i.l.s16 %v717
        %v742 = vunpack.i.h.s16 %v717
        %v743 = vunpack.i.l.s16 %v721
        %v744 = vunpack.i.h.s16 %v721
        %v745 = vunpack.i.l.s16 %v725
        %v746 = vunpack.i.h.s16 %v725
        %v747 = vunpack.i.l.s16 %v728
        %v748 = vunpack.i.h.s16 %v728
        %v749 = vunpack.i.l.s16 %v732
        %v750 = vunpack.i.h.s16 %v732
        %v751 = vunpack.i.l.s16 %v735
        %v752 = vunpack.i.h.s16 %v735
        %v753 = vunpack.i.l.s16 %v738
        %v754 = vunpack.i.h.s16 %v738
        %v755 = vpack.i.b16 %v739, %v739
        %v756 = vpack.i.b16 %v740, %v740
        %v757 = vpack.i.b16 %v741, %v741
        %v758 = vpack.i.b16 %v742, %v742
        %v759 = vpack.i.b16 %v743, %v743
        %v760 = vpack.i.b16 %v744, %v744
        %v761 = vpack.i.b16 %v745, %v745
        %v762 = vpack.i.b16 %v746, %v746
        %v763 = vpack.i.b16 %v747, %v747
        %v764 = vpack.i.b16 %v748, %v748
        %v765 = vpack.i.b16 %v749, %v749
        %v766 = vpack.i.b16 %v750, %v750
        %v767 = vpack.i.b16 %v751, %v751
        %v768 = vpack.i.b16 %v752, %v752
        %v769 = vpack.i.b16 %v753, %v753
        %v770 = vpack.i.b16 %v754, %v754
        %v772 = vunpack.c.l.s4 286326784
        %v773 = vunpack.c.0.s8 %v772
        %v774 = vperm.slane %v755, %v773
        %v776 = vunpack.c.l.s4 286326784
        %v777 = vunpack.c.0.s8 %v776
        %v778 = vperm.slane %v756, %v777
        %v780 = vunpack.c.l.s4 286326784
        %v781 = vunpack.c.0.s8 %v780
        %v782 = vperm.slane %v757, %v781
        %v784 = vunpack.c.l.s4 286326784
        %v785 = vunpack.c.0.s8 %v784
        %v786 = vperm.slane %v758, %v785
        %v788 = vunpack.c.l.s4 286326784
        %v789 = vunpack.c.0.s8 %v788
        %v790 = vperm.slane %v759, %v789
        %v792 = vunpack.c.l.s4 286326784
        %v793 = vunpack.c.0.s8 %v792
        %v794 = vperm.slane %v760, %v793
        %v796 = vunpack.c.l.s4 286326784
        %v797 = vunpack.c.0.s8 %v796
        %v798 = vperm.slane %v761, %v797
        %v800 = vunpack.c.l.s4 286326784
        %v801 = vunpack.c.0.s8 %v800
        %v802 = vperm.slane %v762, %v801
        %v804 = vunpack.c.l.s4 286326784
        %v805 = vunpack.c.0.s8 %v804
        %v806 = vperm.slane %v763, %v805
        %v808 = vunpack.c.l.s4 286326784
        %v809 = vunpack.c.0.s8 %v808
        %v810 = vperm.slane %v764, %v809
        %v812 = vunpack.c.l.s4 286326784
        %v813 = vunpack.c.0.s8 %v812
        %v814 = vperm.slane %v765, %v813
        %v816 = vunpack.c.l.s4 286326784
        %v817 = vunpack.c.0.s8 %v816
        %v818 = vperm.slane %v766, %v817
        %v820 = vunpack.c.l.s4 286326784
        %v821 = vunpack.c.0.s8 %v820
        %v822 = vperm.slane %v767, %v821
        %v824 = vunpack.c.l.s4 286326784
        %v825 = vunpack.c.0.s8 %v824
        %v826 = vperm.slane %v768, %v825
        %v828 = vunpack.c.l.s4 286326784
        %v829 = vunpack.c.0.s8 %v828
        %v830 = vperm.slane %v769, %v829
        %v832 = vunpack.c.l.s4 286326784
        %v833 = vunpack.c.0.s8 %v832
        %v834 = vperm.slane %v770, %v833
        %vm851 = vcmask 57344
        %vm852 = vsmask.f32 256
        %vm853 = vmand %vm851, %vm852
        %v854 = vld [vmem:[%s347] sm:$0x1]
        %v855 = vsel %vm853, %v774, %v854
        %856 = vst [vmem:[%s347] sm:$0x1] %v855
        %v857 = vld [vmem:[%s347 + $0x4] sm:$0x1]
        %v858 = vsel %vm853, %v778, %v857
        %859 = vst [vmem:[%s347 + $0x4] sm:$0x1] %v858
        %v860 = vld [vmem:[%s347 + $0x8] sm:$0x1]
        %v861 = vsel %vm853, %v782, %v860
        %862 = vst [vmem:[%s347 + $0x8] sm:$0x1] %v861
        %v863 = vld [vmem:[%s347 + $0xc] sm:$0x1]
        %v864 = vsel %vm853, %v786, %v863
        %865 = vst [vmem:[%s347 + $0xc] sm:$0x1] %v864
        %v866 = vld [vmem:[%s347 + $0x10] sm:$0x1]
        %v867 = vsel %vm853, %v790, %v866
        %868 = vst [vmem:[%s347 + $0x10] sm:$0x1] %v867
        %v869 = vld [vmem:[%s347 + $0x14] sm:$0x1]
        %v870 = vsel %vm853, %v794, %v869
        %871 = vst [vmem:[%s347 + $0x14] sm:$0x1] %v870
        %v872 = vld [vmem:[%s347 + $0x18] sm:$0x1]
        %v873 = vsel %vm853, %v798, %v872
        %874 = vst [vmem:[%s347 + $0x18] sm:$0x1] %v873
        %v875 = vld [vmem:[%s347 + $0x1c] sm:$0x1]
        %v876 = vsel %vm853, %v802, %v875
        %877 = vst [vmem:[%s347 + $0x1c] sm:$0x1] %v876
        %v878 = vld [vmem:[%s347 + $0x20] sm:$0x1]
        %v879 = vsel %vm853, %v806, %v878
        %880 = vst [vmem:[%s347 + $0x20] sm:$0x1] %v879
        %v881 = vld [vmem:[%s347 + $0x24] sm:$0x1]
        %v882 = vsel %vm853, %v810, %v881
        %883 = vst [vmem:[%s347 + $0x24] sm:$0x1] %v882
        %v884 = vld [vmem:[%s347 + $0x28] sm:$0x1]
        %v885 = vsel %vm853, %v814, %v884
        %886 = vst [vmem:[%s347 + $0x28] sm:$0x1] %v885
        %v887 = vld [vmem:[%s347 + $0x2c] sm:$0x1]
        %v888 = vsel %vm853, %v818, %v887
        %889 = vst [vmem:[%s347 + $0x2c] sm:$0x1] %v888
        %v890 = vld [vmem:[%s347 + $0x30] sm:$0x1]
        %v891 = vsel %vm853, %v822, %v890
        %892 = vst [vmem:[%s347 + $0x30] sm:$0x1] %v891
        %v893 = vld [vmem:[%s347 + $0x34] sm:$0x1]
        %v894 = vsel %vm853, %v826, %v893
        %895 = vst [vmem:[%s347 + $0x34] sm:$0x1] %v894
        %v896 = vld [vmem:[%s347 + $0x38] sm:$0x1]
        %v897 = vsel %vm853, %v830, %v896
        %898 = vst [vmem:[%s347 + $0x38] sm:$0x1] %v897
        %v899 = vld [vmem:[%s347 + $0x3c] sm:$0x1]
        %v900 = vsel %vm853, %v834, %v899
        %901 = vst [vmem:[%s347 + $0x3c] sm:$0x1] %v900
        %902 = vrot.lane.b32.xlu0 %v774, 119
        %v903 = vpop.permute.xlu0 %902
        %904 = vrot.lane.b32.xlu0 %v778, 119
        %v905 = vpop.permute.xlu0 %904
        %906 = vrot.lane.b32.xlu0 %v782, 119
        %v907 = vpop.permute.xlu0 %906
        %908 = vrot.lane.b32.xlu0 %v786, 119
        %v909 = vpop.permute.xlu0 %908
        %910 = vrot.lane.b32.xlu0 %v790, 119
        %v911 = vpop.permute.xlu0 %910
        %912 = vrot.lane.b32.xlu0 %v794, 119
        %v913 = vpop.permute.xlu0 %912
        %914 = vrot.lane.b32.xlu0 %v798, 119
        %v915 = vpop.permute.xlu0 %914
        %916 = vrot.lane.b32.xlu0 %v802, 119
        %v917 = vpop.permute.xlu0 %916
        %918 = vrot.lane.b32.xlu0 %v806, 119
        %v919 = vpop.permute.xlu0 %918
        %920 = vrot.lane.b32.xlu0 %v810, 119
        %v921 = vpop.permute.xlu0 %920
        %922 = vrot.lane.b32.xlu0 %v814, 119
        %v923 = vpop.permute.xlu0 %922
        %924 = vrot.lane.b32.xlu0 %v818, 119
        %v925 = vpop.permute.xlu0 %924
        %926 = vrot.lane.b32.xlu0 %v822, 119
        %v927 = vpop.permute.xlu0 %926
        %928 = vrot.lane.b32.xlu0 %v826, 119
        %v929 = vpop.permute.xlu0 %928
        %930 = vrot.lane.b32.xlu0 %v830, 119
        %v931 = vpop.permute.xlu0 %930
        %932 = vrot.lane.b32.xlu0 %v834, 119
        %v933 = vpop.permute.xlu0 %932
        %vm950 = vsmask.f32 7938
        %vm951 = vmand %vm851, %vm950
        %v952 = vld [vmem:[%s347] sm:$0x1]
        %v953 = vsel %vm951, %v903, %v952
        %954 = vst [vmem:[%s347] sm:$0x1] %v953
        %v955 = vld [vmem:[%s347 + $0x4] sm:$0x1]
        %v956 = vsel %vm951, %v905, %v955
        %957 = vst [vmem:[%s347 + $0x4] sm:$0x1] %v956
        %v958 = vld [vmem:[%s347 + $0x8] sm:$0x1]
        %v959 = vsel %vm951, %v907, %v958
        %960 = vst [vmem:[%s347 + $0x8] sm:$0x1] %v959
        %v961 = vld [vmem:[%s347 + $0xc] sm:$0x1]
        %v962 = vsel %vm951, %v909, %v961
        %963 = vst [vmem:[%s347 + $0xc] sm:$0x1] %v962
        %v964 = vld [vmem:[%s347 + $0x10] sm:$0x1]
        %v965 = vsel %vm951, %v911, %v964
        %966 = vst [vmem:[%s347 + $0x10] sm:$0x1] %v965
        %v967 = vld [vmem:[%s347 + $0x14] sm:$0x1]
        %v968 = vsel %vm951, %v913, %v967
        %969 = vst [vmem:[%s347 + $0x14] sm:$0x1] %v968
        %v970 = vld [vmem:[%s347 + $0x18] sm:$0x1]
        %v971 = vsel %vm951, %v915, %v970
        %972 = vst [vmem:[%s347 + $0x18] sm:$0x1] %v971
        %v973 = vld [vmem:[%s347 + $0x1c] sm:$0x1]
        %v974 = vsel %vm951, %v917, %v973
        %975 = vst [vmem:[%s347 + $0x1c] sm:$0x1] %v974
        %v976 = vld [vmem:[%s347 + $0x20] sm:$0x1]
        %v977 = vsel %vm951, %v919, %v976
        %978 = vst [vmem:[%s347 + $0x20] sm:$0x1] %v977
        %v979 = vld [vmem:[%s347 + $0x24] sm:$0x1]
        %v980 = vsel %vm951, %v921, %v979
        %981 = vst [vmem:[%s347 + $0x24] sm:$0x1] %v980
        %v982 = vld [vmem:[%s347 + $0x28] sm:$0x1]
        %v983 = vsel %vm951, %v923, %v982
        %984 = vst [vmem:[%s347 + $0x28] sm:$0x1] %v983
        %v985 = vld [vmem:[%s347 + $0x2c] sm:$0x1]
        %v986 = vsel %vm951, %v925, %v985
        %987 = vst [vmem:[%s347 + $0x2c] sm:$0x1] %v986
        %v988 = vld [vmem:[%s347 + $0x30] sm:$0x1]
        %v989 = vsel %vm951, %v927, %v988
        %990 = vst [vmem:[%s347 + $0x30] sm:$0x1] %v989
        %v991 = vld [vmem:[%s347 + $0x34] sm:$0x1]
        %v992 = vsel %vm951, %v929, %v991
        %993 = vst [vmem:[%s347 + $0x34] sm:$0x1] %v992
        %v994 = vld [vmem:[%s347 + $0x38] sm:$0x1]
        %v995 = vsel %vm951, %v931, %v994
        %996 = vst [vmem:[%s347 + $0x38] sm:$0x1] %v995
        %v997 = vld [vmem:[%s347 + $0x3c] sm:$0x1]
        %v998 = vsel %vm951, %v933, %v997
        %999 = vst [vmem:[%s347 + $0x3c] sm:$0x1] %v998
        %1000 = vrot.lane.b32.xlu0 %v774, 110
        %v1001 = vpop.permute.xlu0 %1000
        %1002 = vrot.lane.b32.xlu0 %v778, 110
        %v1003 = vpop.permute.xlu0 %1002
        %1004 = vrot.lane.b32.xlu0 %v782, 110
        %v1005 = vpop.permute.xlu0 %1004
        %1006 = vrot.lane.b32.xlu0 %v786, 110
        %v1007 = vpop.permute.xlu0 %1006
        %1008 = vrot.lane.b32.xlu0 %v790, 110
        %v1009 = vpop.permute.xlu0 %1008
        %1010 = vrot.lane.b32.xlu0 %v794, 110
        %v1011 = vpop.permute.xlu0 %1010
        %1012 = vrot.lane.b32.xlu0 %v798, 110
        %v1013 = vpop.permute.xlu0 %1012
        %1014 = vrot.lane.b32.xlu0 %v802, 110
        %v1015 = vpop.permute.xlu0 %1014
        %1016 = vrot.lane.b32.xlu0 %v806, 110
        %v1017 = vpop.permute.xlu0 %1016
        %1018 = vrot.lane.b32.xlu0 %v810, 110
        %v1019 = vpop.permute.xlu0 %1018
        %1020 = vrot.lane.b32.xlu0 %v814, 110
        %v1021 = vpop.permute.xlu0 %1020
        %1022 = vrot.lane.b32.xlu0 %v818, 110
        %v1023 = vpop.permute.xlu0 %1022
        %1024 = vrot.lane.b32.xlu0 %v822, 110
        %v1025 = vpop.permute.xlu0 %1024
        %1026 = vrot.lane.b32.xlu0 %v826, 110
        %v1027 = vpop.permute.xlu0 %1026
        %1028 = vrot.lane.b32.xlu0 %v830, 110
        %v1029 = vpop.permute.xlu0 %1028
        %1030 = vrot.lane.b32.xlu0 %v834, 110
        %v1031 = vpop.permute.xlu0 %1030
        %vm1048 = vcmask 58369
        %vm1049 = vsmask.f32 1280
        %vm1050 = vmand %vm1048, %vm1049
        %v1051 = vld [vmem:[%s347] sm:$0x2]
        %v1052 = vsel %vm1050, %v1001, %v1051
        %1053 = vst [vmem:[%s347] sm:$0x2] %v1052
        %v1054 = vld [vmem:[%s347 + $0x4] sm:$0x2]
        %v1055 = vsel %vm1050, %v1003, %v1054
        %1056 = vst [vmem:[%s347 + $0x4] sm:$0x2] %v1055
        %v1057 = vld [vmem:[%s347 + $0x8] sm:$0x2]
        %v1058 = vsel %vm1050, %v1005, %v1057
        %1059 = vst [vmem:[%s347 + $0x8] sm:$0x2] %v1058
        %v1060 = vld [vmem:[%s347 + $0xc] sm:$0x2]
        %v1061 = vsel %vm1050, %v1007, %v1060
        %1062 = vst [vmem:[%s347 + $0xc] sm:$0x2] %v1061
        %v1063 = vld [vmem:[%s347 + $0x10] sm:$0x2]
        %v1064 = vsel %vm1050, %v1009, %v1063
        %1065 = vst [vmem:[%s347 + $0x10] sm:$0x2] %v1064
        %v1066 = vld [vmem:[%s347 + $0x14] sm:$0x2]
        %v1067 = vsel %vm1050, %v1011, %v1066
        %1068 = vst [vmem:[%s347 + $0x14] sm:$0x2] %v1067
        %v1069 = vld [vmem:[%s347 + $0x18] sm:$0x2]
        %v1070 = vsel %vm1050, %v1013, %v1069
        %1071 = vst [vmem:[%s347 + $0x18] sm:$0x2] %v1070
        %v1072 = vld [vmem:[%s347 + $0x1c] sm:$0x2]
        %v1073 = vsel %vm1050, %v1015, %v1072
        %1074 = vst [vmem:[%s347 + $0x1c] sm:$0x2] %v1073
        %v1075 = vld [vmem:[%s347 + $0x20] sm:$0x2]
        %v1076 = vsel %vm1050, %v1017, %v1075
        %1077 = vst [vmem:[%s347 + $0x20] sm:$0x2] %v1076
        %v1078 = vld [vmem:[%s347 + $0x24] sm:$0x2]
        %v1079 = vsel %vm1050, %v1019, %v1078
        %1080 = vst [vmem:[%s347 + $0x24] sm:$0x2] %v1079
        %v1081 = vld [vmem:[%s347 + $0x28] sm:$0x2]
        %v1082 = vsel %vm1050, %v1021, %v1081
        %1083 = vst [vmem:[%s347 + $0x28] sm:$0x2] %v1082
        %v1084 = vld [vmem:[%s347 + $0x2c] sm:$0x2]
        %v1085 = vsel %vm1050, %v1023, %v1084
        %1086 = vst [vmem:[%s347 + $0x2c] sm:$0x2] %v1085
        %v1087 = vld [vmem:[%s347 + $0x30] sm:$0x2]
        %v1088 = vsel %vm1050, %v1025, %v1087
        %1089 = vst [vmem:[%s347 + $0x30] sm:$0x2] %v1088
        %v1090 = vld [vmem:[%s347 + $0x34] sm:$0x2]
        %v1091 = vsel %vm1050, %v1027, %v1090
        %1092 = vst [vmem:[%s347 + $0x34] sm:$0x2] %v1091
        %v1093 = vld [vmem:[%s347 + $0x38] sm:$0x2]
        %v1094 = vsel %vm1050, %v1029, %v1093
        %1095 = vst [vmem:[%s347 + $0x38] sm:$0x2] %v1094
        %v1096 = vld [vmem:[%s347 + $0x3c] sm:$0x2]
        %v1097 = vsel %vm1050, %v1031, %v1096
        %1098 = vst [vmem:[%s347 + $0x3c] sm:$0x2] %v1097
        %1099 = vrot.lane.b32.xlu0 %v774, 101
        %v1100 = vpop.permute.xlu0 %1099
        %1101 = vrot.lane.b32.xlu0 %v778, 101
        %v1102 = vpop.permute.xlu0 %1101
        %1103 = vrot.lane.b32.xlu0 %v782, 101
        %v1104 = vpop.permute.xlu0 %1103
        %1105 = vrot.lane.b32.xlu0 %v786, 101
        %v1106 = vpop.permute.xlu0 %1105
        %1107 = vrot.lane.b32.xlu0 %v790, 101
        %v1108 = vpop.permute.xlu0 %1107
        %1109 = vrot.lane.b32.xlu0 %v794, 101
        %v1110 = vpop.permute.xlu0 %1109
        %1111 = vrot.lane.b32.xlu0 %v798, 101
        %v1112 = vpop.permute.xlu0 %1111
        %1113 = vrot.lane.b32.xlu0 %v802, 101
        %v1114 = vpop.permute.xlu0 %1113
        %1115 = vrot.lane.b32.xlu0 %v806, 101
        %v1116 = vpop.permute.xlu0 %1115
        %1117 = vrot.lane.b32.xlu0 %v810, 101
        %v1118 = vpop.permute.xlu0 %1117
        %1119 = vrot.lane.b32.xlu0 %v814, 101
        %v1120 = vpop.permute.xlu0 %1119
        %1121 = vrot.lane.b32.xlu0 %v818, 101
        %v1122 = vpop.permute.xlu0 %1121
        %1123 = vrot.lane.b32.xlu0 %v822, 101
        %v1124 = vpop.permute.xlu0 %1123
        %1125 = vrot.lane.b32.xlu0 %v826, 101
        %v1126 = vpop.permute.xlu0 %1125
        %1127 = vrot.lane.b32.xlu0 %v830, 101
        %v1128 = vpop.permute.xlu0 %1127
        %1129 = vrot.lane.b32.xlu0 %v834, 101
        %v1130 = vpop.permute.xlu0 %1129
        %vm1147 = vsmask.f32 7942
        %vm1148 = vmand %vm1048, %vm1147
        %v1149 = vld [vmem:[%s347] sm:$0x2]
        %v1150 = vsel %vm1148, %v1100, %v1149
        %1151 = vst [vmem:[%s347] sm:$0x2] %v1150
        %v1152 = vld [vmem:[%s347 + $0x4] sm:$0x2]
        %v1153 = vsel %vm1148, %v1102, %v1152
        %1154 = vst [vmem:[%s347 + $0x4] sm:$0x2] %v1153
        %v1155 = vld [vmem:[%s347 + $0x8] sm:$0x2]
        %v1156 = vsel %vm1148, %v1104, %v1155
        %1157 = vst [vmem:[%s347 + $0x8] sm:$0x2] %v1156
        %v1158 = vld [vmem:[%s347 + $0xc] sm:$0x2]
        %v1159 = vsel %vm1148, %v1106, %v1158
        %1160 = vst [vmem:[%s347 + $0xc] sm:$0x2] %v1159
        %v1161 = vld [vmem:[%s347 + $0x10] sm:$0x2]
        %v1162 = vsel %vm1148, %v1108, %v1161
        %1163 = vst [vmem:[%s347 + $0x10] sm:$0x2] %v1162
        %v1164 = vld [vmem:[%s347 + $0x14] sm:$0x2]
        %v1165 = vsel %vm1148, %v1110, %v1164
        %1166 = vst [vmem:[%s347 + $0x14] sm:$0x2] %v1165
        %v1167 = vld [vmem:[%s347 + $0x18] sm:$0x2]
        %v1168 = vsel %vm1148, %v1112, %v1167
        %1169 = vst [vmem:[%s347 + $0x18] sm:$0x2] %v1168
        %v1170 = vld [vmem:[%s347 + $0x1c] sm:$0x2]
        %v1171 = vsel %vm1148, %v1114, %v1170
        %1172 = vst [vmem:[%s347 + $0x1c] sm:$0x2] %v1171
        %v1173 = vld [vmem:[%s347 + $0x20] sm:$0x2]
        %v1174 = vsel %vm1148, %v1116, %v1173
        %1175 = vst [vmem:[%s347 + $0x20] sm:$0x2] %v1174
        %v1176 = vld [vmem:[%s347 + $0x24] sm:$0x2]
        %v1177 = vsel %vm1148, %v1118, %v1176
        %1178 = vst [vmem:[%s347 + $0x24] sm:$0x2] %v1177
        %v1179 = vld [vmem:[%s347 + $0x28] sm:$0x2]
        %v1180 = vsel %vm1148, %v1120, %v1179
        %1181 = vst [vmem:[%s347 + $0x28] sm:$0x2] %v1180
        %v1182 = vld [vmem:[%s347 + $0x2c] sm:$0x2]
        %v1183 = vsel %vm1148, %v1122, %v1182
        %1184 = vst [vmem:[%s347 + $0x2c] sm:$0x2] %v1183
        %v1185 = vld [vmem:[%s347 + $0x30] sm:$0x2]
        %v1186 = vsel %vm1148, %v1124, %v1185
        %1187 = vst [vmem:[%s347 + $0x30] sm:$0x2] %v1186
        %v1188 = vld [vmem:[%s347 + $0x34] sm:$0x2]
        %v1189 = vsel %vm1148, %v1126, %v1188
        %1190 = vst [vmem:[%s347 + $0x34] sm:$0x2] %v1189
        %v1191 = vld [vmem:[%s347 + $0x38] sm:$0x2]
        %v1192 = vsel %vm1148, %v1128, %v1191
        %1193 = vst [vmem:[%s347 + $0x38] sm:$0x2] %v1192
        %v1194 = vld [vmem:[%s347 + $0x3c] sm:$0x2]
        %v1195 = vsel %vm1148, %v1130, %v1194
        %1196 = vst [vmem:[%s347 + $0x3c] sm:$0x2] %v1195
        %1197 = vrot.lane.b32.xlu0 %v774, 92
        %v1198 = vpop.permute.xlu0 %1197
        %1199 = vrot.lane.b32.xlu0 %v778, 92
        %v1200 = vpop.permute.xlu0 %1199
        %1201 = vrot.lane.b32.xlu0 %v782, 92
        %v1202 = vpop.permute.xlu0 %1201
        %1203 = vrot.lane.b32.xlu0 %v786, 92
        %v1204 = vpop.permute.xlu0 %1203
        %1205 = vrot.lane.b32.xlu0 %v790, 92
        %v1206 = vpop.permute.xlu0 %1205
        %1207 = vrot.lane.b32.xlu0 %v794, 92
        %v1208 = vpop.permute.xlu0 %1207
        %1209 = vrot.lane.b32.xlu0 %v798, 92
        %v1210 = vpop.permute.xlu0 %1209
        %1211 = vrot.lane.b32.xlu0 %v802, 92
        %v1212 = vpop.permute.xlu0 %1211
        %1213 = vrot.lane.b32.xlu0 %v806, 92
        %v1214 = vpop.permute.xlu0 %1213
        %1215 = vrot.lane.b32.xlu0 %v810, 92
        %v1216 = vpop.permute.xlu0 %1215
        %1217 = vrot.lane.b32.xlu0 %v814, 92
        %v1218 = vpop.permute.xlu0 %1217
        %1219 = vrot.lane.b32.xlu0 %v818, 92
        %v1220 = vpop.permute.xlu0 %1219
        %1221 = vrot.lane.b32.xlu0 %v822, 92
        %v1222 = vpop.permute.xlu0 %1221
        %1223 = vrot.lane.b32.xlu0 %v826, 92
        %v1224 = vpop.permute.xlu0 %1223
        %1225 = vrot.lane.b32.xlu0 %v830, 92
        %v1226 = vpop.permute.xlu0 %1225
        %1227 = vrot.lane.b32.xlu0 %v834, 92
        %v1228 = vpop.permute.xlu0 %1227
        %vm1245 = vcmask 59394
        %vm1246 = vsmask.f32 2304
        %vm1247 = vmand %vm1245, %vm1246
        %v1248 = vld [vmem:[%s347] sm:$0x4]
        %v1249 = vsel %vm1247, %v1198, %v1248
        %1250 = vst [vmem:[%s347] sm:$0x4] %v1249
        %v1251 = vld [vmem:[%s347 + $0x4] sm:$0x4]
        %v1252 = vsel %vm1247, %v1200, %v1251
        %1253 = vst [vmem:[%s347 + $0x4] sm:$0x4] %v1252
        %v1254 = vld [vmem:[%s347 + $0x8] sm:$0x4]
        %v1255 = vsel %vm1247, %v1202, %v1254
        %1256 = vst [vmem:[%s347 + $0x8] sm:$0x4] %v1255
        %v1257 = vld [vmem:[%s347 + $0xc] sm:$0x4]
        %v1258 = vsel %vm1247, %v1204, %v1257
        %1259 = vst [vmem:[%s347 + $0xc] sm:$0x4] %v1258
        %v1260 = vld [vmem:[%s347 + $0x10] sm:$0x4]
        %v1261 = vsel %vm1247, %v1206, %v1260
        %1262 = vst [vmem:[%s347 + $0x10] sm:$0x4] %v1261
        %v1263 = vld [vmem:[%s347 + $0x14] sm:$0x4]
        %v1264 = vsel %vm1247, %v1208, %v1263
        %1265 = vst [vmem:[%s347 + $0x14] sm:$0x4] %v1264
        %v1266 = vld [vmem:[%s347 + $0x18] sm:$0x4]
        %v1267 = vsel %vm1247, %v1210, %v1266
        %1268 = vst [vmem:[%s347 + $0x18] sm:$0x4] %v1267
        %v1269 = vld [vmem:[%s347 + $0x1c] sm:$0x4]
        %v1270 = vsel %vm1247, %v1212, %v1269
        %1271 = vst [vmem:[%s347 + $0x1c] sm:$0x4] %v1270
        %v1272 = vld [vmem:[%s347 + $0x20] sm:$0x4]
        %v1273 = vsel %vm1247, %v1214, %v1272
        %1274 = vst [vmem:[%s347 + $0x20] sm:$0x4] %v1273
        %v1275 = vld [vmem:[%s347 + $0x24] sm:$0x4]
        %v1276 = vsel %vm1247, %v1216, %v1275
        %1277 = vst [vmem:[%s347 + $0x24] sm:$0x4] %v1276
        %v1278 = vld [vmem:[%s347 + $0x28] sm:$0x4]
        %v1279 = vsel %vm1247, %v1218, %v1278
        %1280 = vst [vmem:[%s347 + $0x28] sm:$0x4] %v1279
        %v1281 = vld [vmem:[%s347 + $0x2c] sm:$0x4]
        %v1282 = vsel %vm1247, %v1220, %v1281
        %1283 = vst [vmem:[%s347 + $0x2c] sm:$0x4] %v1282
        %v1284 = vld [vmem:[%s347 + $0x30] sm:$0x4]
        %v1285 = vsel %vm1247, %v1222, %v1284
        %1286 = vst [vmem:[%s347 + $0x30] sm:$0x4] %v1285
        %v1287 = vld [vmem:[%s347 + $0x34] sm:$0x4]
        %v1288 = vsel %vm1247, %v1224, %v1287
        %1289 = vst [vmem:[%s347 + $0x34] sm:$0x4] %v1288
        %v1290 = vld [vmem:[%s347 + $0x38] sm:$0x4]
        %v1291 = vsel %vm1247, %v1226, %v1290
        %1292 = vst [vmem:[%s347 + $0x38] sm:$0x4] %v1291
        %v1293 = vld [vmem:[%s347 + $0x3c] sm:$0x4]
        %v1294 = vsel %vm1247, %v1228, %v1293
        %1295 = vst [vmem:[%s347 + $0x3c] sm:$0x4] %v1294
        %1296 = vrot.lane.b32.xlu0 %v774, 83
        %v1297 = vpop.permute.xlu0 %1296
        %1298 = vrot.lane.b32.xlu0 %v778, 83
        %v1299 = vpop.permute.xlu0 %1298
        %1300 = vrot.lane.b32.xlu0 %v782, 83
        %v1301 = vpop.permute.xlu0 %1300
        %1302 = vrot.lane.b32.xlu0 %v786, 83
        %v1303 = vpop.permute.xlu0 %1302
        %1304 = vrot.lane.b32.xlu0 %v790, 83
        %v1305 = vpop.permute.xlu0 %1304
        %1306 = vrot.lane.b32.xlu0 %v794, 83
        %v1307 = vpop.permute.xlu0 %1306
        %1308 = vrot.lane.b32.xlu0 %v798, 83
        %v1309 = vpop.permute.xlu0 %1308
        %1310 = vrot.lane.b32.xlu0 %v802, 83
        %v1311 = vpop.permute.xlu0 %1310
        %1312 = vrot.lane.b32.xlu0 %v806, 83
        %v1313 = vpop.permute.xlu0 %1312
        %1314 = vrot.lane.b32.xlu0 %v810, 83
        %v1315 = vpop.permute.xlu0 %1314
        %1316 = vrot.lane.b32.xlu0 %v814, 83
        %v1317 = vpop.permute.xlu0 %1316
        %1318 = vrot.lane.b32.xlu0 %v818, 83
        %v1319 = vpop.permute.xlu0 %1318
        %1320 = vrot.lane.b32.xlu0 %v822, 83
        %v1321 = vpop.permute.xlu0 %1320
        %1322 = vrot.lane.b32.xlu0 %v826, 83
        %v1323 = vpop.permute.xlu0 %1322
        %1324 = vrot.lane.b32.xlu0 %v830, 83
        %v1325 = vpop.permute.xlu0 %1324
        %1326 = vrot.lane.b32.xlu0 %v834, 83
        %v1327 = vpop.permute.xlu0 %1326
        %vm1344 = vsmask.f32 7946
        %vm1345 = vmand %vm1245, %vm1344
        %v1346 = vld [vmem:[%s347] sm:$0x4]
        %v1347 = vsel %vm1345, %v1297, %v1346
        %1348 = vst [vmem:[%s347] sm:$0x4] %v1347
        %v1349 = vld [vmem:[%s347 + $0x4] sm:$0x4]
        %v1350 = vsel %vm1345, %v1299, %v1349
        %1351 = vst [vmem:[%s347 + $0x4] sm:$0x4] %v1350
        %v1352 = vld [vmem:[%s347 + $0x8] sm:$0x4]
        %v1353 = vsel %vm1345, %v1301, %v1352
        %1354 = vst [vmem:[%s347 + $0x8] sm:$0x4] %v1353
        %v1355 = vld [vmem:[%s347 + $0xc] sm:$0x4]
        %v1356 = vsel %vm1345, %v1303, %v1355
        %1357 = vst [vmem:[%s347 + $0xc] sm:$0x4] %v1356
        %v1358 = vld [vmem:[%s347 + $0x10] sm:$0x4]
        %v1359 = vsel %vm1345, %v1305, %v1358
        %1360 = vst [vmem:[%s347 + $0x10] sm:$0x4] %v1359
        %v1361 = vld [vmem:[%s347 + $0x14] sm:$0x4]
        %v1362 = vsel %vm1345, %v1307, %v1361
        %1363 = vst [vmem:[%s347 + $0x14] sm:$0x4] %v1362
        %v1364 = vld [vmem:[%s347 + $0x18] sm:$0x4]
        %v1365 = vsel %vm1345, %v1309, %v1364
        %1366 = vst [vmem:[%s347 + $0x18] sm:$0x4] %v1365
        %v1367 = vld [vmem:[%s347 + $0x1c] sm:$0x4]
        %v1368 = vsel %vm1345, %v1311, %v1367
        %1369 = vst [vmem:[%s347 + $0x1c] sm:$0x4] %v1368
        %v1370 = vld [vmem:[%s347 + $0x20] sm:$0x4]
        %v1371 = vsel %vm1345, %v1313, %v1370
        %1372 = vst [vmem:[%s347 + $0x20] sm:$0x4] %v1371
        %v1373 = vld [vmem:[%s347 + $0x24] sm:$0x4]
        %v1374 = vsel %vm1345, %v1315, %v1373
        %1375 = vst [vmem:[%s347 + $0x24] sm:$0x4] %v1374
        %v1376 = vld [vmem:[%s347 + $0x28] sm:$0x4]
        %v1377 = vsel %vm1345, %v1317, %v1376
        %1378 = vst [vmem:[%s347 + $0x28] sm:$0x4] %v1377
        %v1379 = vld [vmem:[%s347 + $0x2c] sm:$0x4]
        %v1380 = vsel %vm1345, %v1319, %v1379
        %1381 = vst [vmem:[%s347 + $0x2c] sm:$0x4] %v1380
        %v1382 = vld [vmem:[%s347 + $0x30] sm:$0x4]
        %v1383 = vsel %vm1345, %v1321, %v1382
        %1384 = vst [vmem:[%s347 + $0x30] sm:$0x4] %v1383
        %v1385 = vld [vmem:[%s347 + $0x34] sm:$0x4]
        %v1386 = vsel %vm1345, %v1323, %v1385
        %1387 = vst [vmem:[%s347 + $0x34] sm:$0x4] %v1386
        %v1388 = vld [vmem:[%s347 + $0x38] sm:$0x4]
        %v1389 = vsel %vm1345, %v1325, %v1388
        %1390 = vst [vmem:[%s347 + $0x38] sm:$0x4] %v1389
        %v1391 = vld [vmem:[%s347 + $0x3c] sm:$0x4]
        %v1392 = vsel %vm1345, %v1327, %v1391
        %1393 = vst [vmem:[%s347 + $0x3c] sm:$0x4] %v1392
        %1394 = vrot.lane.b32.xlu0 %v774, 74
        %v1395 = vpop.permute.xlu0 %1394
        %1396 = vrot.lane.b32.xlu0 %v778, 74
        %v1397 = vpop.permute.xlu0 %1396
        %1398 = vrot.lane.b32.xlu0 %v782, 74
        %v1399 = vpop.permute.xlu0 %1398
        %1400 = vrot.lane.b32.xlu0 %v786, 74
        %v1401 = vpop.permute.xlu0 %1400
        %1402 = vrot.lane.b32.xlu0 %v790, 74
        %v1403 = vpop.permute.xlu0 %1402
        %1404 = vrot.lane.b32.xlu0 %v794, 74
        %v1405 = vpop.permute.xlu0 %1404
        %1406 = vrot.lane.b32.xlu0 %v798, 74
        %v1407 = vpop.permute.xlu0 %1406
        %1408 = vrot.lane.b32.xlu0 %v802, 74
        %v1409 = vpop.permute.xlu0 %1408
        %1410 = vrot.lane.b32.xlu0 %v806, 74
        %v1411 = vpop.permute.xlu0 %1410
        %1412 = vrot.lane.b32.xlu0 %v810, 74
        %v1413 = vpop.permute.xlu0 %1412
        %1414 = vrot.lane.b32.xlu0 %v814, 74
        %v1415 = vpop.permute.xlu0 %1414
        %1416 = vrot.lane.b32.xlu0 %v818, 74
        %v1417 = vpop.permute.xlu0 %1416
        %1418 = vrot.lane.b32.xlu0 %v822, 74
        %v1419 = vpop.permute.xlu0 %1418
        %1420 = vrot.lane.b32.xlu0 %v826, 74
        %v1421 = vpop.permute.xlu0 %1420
        %1422 = vrot.lane.b32.xlu0 %v830, 74
        %v1423 = vpop.permute.xlu0 %1422
        %1424 = vrot.lane.b32.xlu0 %v834, 74
        %v1425 = vpop.permute.xlu0 %1424
        %vm1442 = vcmask 60419
        %vm1443 = vsmask.f32 3328
        %vm1444 = vmand %vm1442, %vm1443
        %v1445 = vld [vmem:[%s347] sm:$0x8]
        %v1446 = vsel %vm1444, %v1395, %v1445
        %1447 = vst [vmem:[%s347] sm:$0x8] %v1446
        %v1448 = vld [vmem:[%s347 + $0x4] sm:$0x8]
        %v1449 = vsel %vm1444, %v1397, %v1448
        %1450 = vst [vmem:[%s347 + $0x4] sm:$0x8] %v1449
        %v1451 = vld [vmem:[%s347 + $0x8] sm:$0x8]
        %v1452 = vsel %vm1444, %v1399, %v1451
        %1453 = vst [vmem:[%s347 + $0x8] sm:$0x8] %v1452
        %v1454 = vld [vmem:[%s347 + $0xc] sm:$0x8]
        %v1455 = vsel %vm1444, %v1401, %v1454
        %1456 = vst [vmem:[%s347 + $0xc] sm:$0x8] %v1455
        %v1457 = vld [vmem:[%s347 + $0x10] sm:$0x8]
        %v1458 = vsel %vm1444, %v1403, %v1457
        %1459 = vst [vmem:[%s347 + $0x10] sm:$0x8] %v1458
        %v1460 = vld [vmem:[%s347 + $0x14] sm:$0x8]
        %v1461 = vsel %vm1444, %v1405, %v1460
        %1462 = vst [vmem:[%s347 + $0x14] sm:$0x8] %v1461
        %v1463 = vld [vmem:[%s347 + $0x18] sm:$0x8]
        %v1464 = vsel %vm1444, %v1407, %v1463
        %1465 = vst [vmem:[%s347 + $0x18] sm:$0x8] %v1464
        %v1466 = vld [vmem:[%s347 + $0x1c] sm:$0x8]
        %v1467 = vsel %vm1444, %v1409, %v1466
        %1468 = vst [vmem:[%s347 + $0x1c] sm:$0x8] %v1467
        %v1469 = vld [vmem:[%s347 + $0x20] sm:$0x8]
        %v1470 = vsel %vm1444, %v1411, %v1469
        %1471 = vst [vmem:[%s347 + $0x20] sm:$0x8] %v1470
        %v1472 = vld [vmem:[%s347 + $0x24] sm:$0x8]
        %v1473 = vsel %vm1444, %v1413, %v1472
        %1474 = vst [vmem:[%s347 + $0x24] sm:$0x8] %v1473
        %v1475 = vld [vmem:[%s347 + $0x28] sm:$0x8]
        %v1476 = vsel %vm1444, %v1415, %v1475
        %1477 = vst [vmem:[%s347 + $0x28] sm:$0x8] %v1476
        %v1478 = vld [vmem:[%s347 + $0x2c] sm:$0x8]
        %v1479 = vsel %vm1444, %v1417, %v1478
        %1480 = vst [vmem:[%s347 + $0x2c] sm:$0x8] %v1479
        %v1481 = vld [vmem:[%s347 + $0x30] sm:$0x8]
        %v1482 = vsel %vm1444, %v1419, %v1481
        %1483 = vst [vmem:[%s347 + $0x30] sm:$0x8] %v1482
        %v1484 = vld [vmem:[%s347 + $0x34] sm:$0x8]
        %v1485 = vsel %vm1444, %v1421, %v1484
        %1486 = vst [vmem:[%s347 + $0x34] sm:$0x8] %v1485
        %v1487 = vld [vmem:[%s347 + $0x38] sm:$0x8]
        %v1488 = vsel %vm1444, %v1423, %v1487
        %1489 = vst [vmem:[%s347 + $0x38] sm:$0x8] %v1488
        %v1490 = vld [vmem:[%s347 + $0x3c] sm:$0x8]
        %v1491 = vsel %vm1444, %v1425, %v1490
        %1492 = vst [vmem:[%s347 + $0x3c] sm:$0x8] %v1491
        %1493 = vrot.lane.b32.xlu0 %v774, 65
        %v1494 = vpop.permute.xlu0 %1493
        %1495 = vrot.lane.b32.xlu0 %v778, 65
        %v1496 = vpop.permute.xlu0 %1495
        %1497 = vrot.lane.b32.xlu0 %v782, 65
        %v1498 = vpop.permute.xlu0 %1497
        %1499 = vrot.lane.b32.xlu0 %v786, 65
        %v1500 = vpop.permute.xlu0 %1499
        %1501 = vrot.lane.b32.xlu0 %v790, 65
        %v1502 = vpop.permute.xlu0 %1501
        %1503 = vrot.lane.b32.xlu0 %v794, 65
        %v1504 = vpop.permute.xlu0 %1503
        %1505 = vrot.lane.b32.xlu0 %v798, 65
        %v1506 = vpop.permute.xlu0 %1505
        %1507 = vrot.lane.b32.xlu0 %v802, 65
        %v1508 = vpop.permute.xlu0 %1507
        %1509 = vrot.lane.b32.xlu0 %v806, 65
        %v1510 = vpop.permute.xlu0 %1509
        %1511 = vrot.lane.b32.xlu0 %v810, 65
        %v1512 = vpop.permute.xlu0 %1511
        %1513 = vrot.lane.b32.xlu0 %v814, 65
        %v1514 = vpop.permute.xlu0 %1513
        %1515 = vrot.lane.b32.xlu0 %v818, 65
        %v1516 = vpop.permute.xlu0 %1515
        %1517 = vrot.lane.b32.xlu0 %v822, 65
        %v1518 = vpop.permute.xlu0 %1517
        %1519 = vrot.lane.b32.xlu0 %v826, 65
        %v1520 = vpop.permute.xlu0 %1519
        %1521 = vrot.lane.b32.xlu0 %v830, 65
        %v1522 = vpop.permute.xlu0 %1521
        %1523 = vrot.lane.b32.xlu0 %v834, 65
        %v1524 = vpop.permute.xlu0 %1523
        %vm1541 = vsmask.f32 7950
        %vm1542 = vmand %vm1442, %vm1541
        %v1543 = vld [vmem:[%s347] sm:$0x8]
        %v1544 = vsel %vm1542, %v1494, %v1543
        %1545 = vst [vmem:[%s347] sm:$0x8] %v1544
        %v1546 = vld [vmem:[%s347 + $0x4] sm:$0x8]
        %v1547 = vsel %vm1542, %v1496, %v1546
        %1548 = vst [vmem:[%s347 + $0x4] sm:$0x8] %v1547
        %v1549 = vld [vmem:[%s347 + $0x8] sm:$0x8]
        %v1550 = vsel %vm1542, %v1498, %v1549
        %1551 = vst [vmem:[%s347 + $0x8] sm:$0x8] %v1550
        %v1552 = vld [vmem:[%s347 + $0xc] sm:$0x8]
        %v1553 = vsel %vm1542, %v1500, %v1552
        %1554 = vst [vmem:[%s347 + $0xc] sm:$0x8] %v1553
        %v1555 = vld [vmem:[%s347 + $0x10] sm:$0x8]
        %v1556 = vsel %vm1542, %v1502, %v1555
        %1557 = vst [vmem:[%s347 + $0x10] sm:$0x8] %v1556
        %v1558 = vld [vmem:[%s347 + $0x14] sm:$0x8]
        %v1559 = vsel %vm1542, %v1504, %v1558
        %1560 = vst [vmem:[%s347 + $0x14] sm:$0x8] %v1559
        %v1561 = vld [vmem:[%s347 + $0x18] sm:$0x8]
        %v1562 = vsel %vm1542, %v1506, %v1561
        %1563 = vst [vmem:[%s347 + $0x18] sm:$0x8] %v1562
        %v1564 = vld [vmem:[%s347 + $0x1c] sm:$0x8]
        %v1565 = vsel %vm1542, %v1508, %v1564
        %1566 = vst [vmem:[%s347 + $0x1c] sm:$0x8] %v1565
        %v1567 = vld [vmem:[%s347 + $0x20] sm:$0x8]
        %v1568 = vsel %vm1542, %v1510, %v1567
        %1569 = vst [vmem:[%s347 + $0x20] sm:$0x8] %v1568
        %v1570 = vld [vmem:[%s347 + $0x24] sm:$0x8]
        %v1571 = vsel %vm1542, %v1512, %v1570
        %1572 = vst [vmem:[%s347 + $0x24] sm:$0x8] %v1571
        %v1573 = vld [vmem:[%s347 + $0x28] sm:$0x8]
        %v1574 = vsel %vm1542, %v1514, %v1573
        %1575 = vst [vmem:[%s347 + $0x28] sm:$0x8] %v1574
        %v1576 = vld [vmem:[%s347 + $0x2c] sm:$0x8]
        %v1577 = vsel %vm1542, %v1516, %v1576
        %1578 = vst [vmem:[%s347 + $0x2c] sm:$0x8] %v1577
        %v1579 = vld [vmem:[%s347 + $0x30] sm:$0x8]
        %v1580 = vsel %vm1542, %v1518, %v1579
        %1581 = vst [vmem:[%s347 + $0x30] sm:$0x8] %v1580
        %v1582 = vld [vmem:[%s347 + $0x34] sm:$0x8]
        %v1583 = vsel %vm1542, %v1520, %v1582
        %1584 = vst [vmem:[%s347 + $0x34] sm:$0x8] %v1583
        %v1585 = vld [vmem:[%s347 + $0x38] sm:$0x8]
        %v1586 = vsel %vm1542, %v1522, %v1585
        %1587 = vst [vmem:[%s347 + $0x38] sm:$0x8] %v1586
        %v1588 = vld [vmem:[%s347 + $0x3c] sm:$0x8]
        %v1589 = vsel %vm1542, %v1524, %v1588
        %1590 = vst [vmem:[%s347 + $0x3c] sm:$0x8] %v1589
        %s1591 = smul.u32 16, %s19
        %p1592 = scmp.lt.s32.totalorder %s18, 1
        %s1593 = scalar_select %p1592, %s18, 1
        %p1594 = scmp.lt.s32.totalorder %s1591, 31
        %s1595 = scalar_select %p1594, %s1591, 31
        %s1596 = smul.addr %s1593, 32
        %s1597 = sadd.s32 %s1595, %s1596
        %s1598 = smul.addr %s1597, 4
        %s1599 = scalar_lea.vmem %s3, %s1598
        // Predicated region
        $region74: #{tpu_custom_call.1} parent=68 // pred_check
          %p1600 = pneg %p124
        $region75: #{tpu_custom_call.1} parent=68 // pred_check_branch
          %1602 = sbr.rel (%p1600) target = $region77
        $region76: #{tpu_custom_call.1} parent=68 // pred_region
          %s1603 = smul.u32 16, %s19
        $region77: #{tpu_custom_call.1} parent=68 // pred_fallthru
          _
      $region69: #{tpu_custom_call.1} parent=5 // pred_fallthru
        _
      %p1604 = scmp.le.s32.totalorder 2, %s9
      // Predicated region
      $region78: #{tpu_custom_call.1} parent=5 // pred_check
        %p1605 = pneg %p1604
      $region79: #{tpu_custom_call.1} parent=5 // pred_check_branch
        %1607 = sbr.rel (%p1605) target = $region81
      $region80: #{tpu_custom_call.1} parent=5 // pred_region
        %s1608 = ssub.s32 %s9, 2
        // Predicated region
        $region82: #{tpu_custom_call.1} parent=80 // pred_check
          %p1609 = pneg %p130
        $region83: #{tpu_custom_call.1} parent=80 // pred_check_branch
          %1611 = sbr.rel (%p1609) target = $region85
        $region84: #{tpu_custom_call.1} parent=80 // pred_region
          %s1612 = smul.u32 16, %s21
          %p1613 = scmp.lt.s32.totalorder %s20, 1
          %s1614 = scalar_select %p1613, %s20, 1
          %p1615 = scmp.lt.s32.totalorder %s1612, 31
          %s1616 = scalar_select %p1615, %s1612, 31
          %s1617 = smul.addr %s1614, 32
          %s1618 = sadd.s32 %s1616, %s1617
          %s1619 = smul.addr %s1618, 4
          %s1620 = scalar_lea.vmem %s3, %s1619
        $region85: #{tpu_custom_call.1} parent=80 // pred_fallthru
          _
      $region81: #{tpu_custom_call.1} parent=5 // pred_fallthru
        _
    $region6: #{tpu_custom_call.1} parent=1 // loop_footer
      %s13 = sadd.s32 1, %s9
    $region7: #{tpu_custom_call.1} parent=1 // loop_footer_branch
      %8 = sbr.rel target = $region3
    $region8: #{tpu_custom_call.1} parent=1 // loop_exit
      _

</llo_original>
